<compile_context>
chip_gen: v7x
topology: tpu7x:2x2x1
jax: 0.10.0
libtpu: 0.0.40
codegen_flags: <defaults>
</compile_context>

<pallas_src>
import jax
import jax.numpy as jnp
from jax.experimental import pallas as pl
from jax.experimental.pallas import tpu as pltpu


def gru_kernel(x_ref, lens_ref, wih1_ref, bi_ref, wstep_ref, bhn_ref,
               wfc_ref, bfc_ref, out_ref, gi_scr):
    """Whole 2-layer GRU forward in one invocation (layer-skewed recurrence)."""
    TB = x_ref.shape[0]
    B = lens_ref.shape[0]
    T = TB // B
    H2 = wstep_ref.shape[0]          # 2H = 128: lanes [0:H)=layer-1, [H:2H)=layer-2
    H = H2 // 2

    # ---- prologue: layer-1 input projection for ALL timesteps (one MXU dot) ----
    # gi_base columns (6H, 128-aligned blocks): [gi1_r | bi2_r | gi1_z | bi2_z | gi1_n | bi2_n]
    gi_scr[...] = (jnp.dot(x_ref[...], wih1_ref[...],
                           preferred_element_type=jnp.float32) + bi_ref[...])

    # ---- loop invariants hoisted out of the unrolled recurrence ----
    lane = jax.lax.broadcasted_iota(jnp.int32, (B, H2), 1)
    lo = (lane >= H).astype(jnp.int32)            # layer-2 half is skewed 1 step later
    hi = lens_ref[...] + lo                       # (B, 2H): update iff lo <= t < hi
    bhn = jnp.broadcast_to(bhn_ref[...], (B, H2))  # [b_hn1 | b_hn2]

    def step(t, h):
        # h = [h1(t-1) | h2(t-2)]; this iteration produces layer-1 step t
        # (lanes [0:H)) and layer-2 step t-1 (lanes [H:2H)).
        idx = pl.multiple_of(jnp.minimum(t, T - 1) * B, B)  # clamp for extra skew iter
        gi = gi_scr[pl.ds(idx, B), :]                       # (B, 6H)
        # ONE fused MXU dot; result columns (8H, all 128-aligned blocks):
        # [gh1_r | g2_r | gh1_z | g2_z | gh1_n | gh2_n | 0 | gi2_n]
        gh = jnp.dot(h.astype(jnp.bfloat16), wstep_ref[...],
                     preferred_element_type=jnp.float32)    # (B, 8H)
        rz = jax.nn.sigmoid(gi[:, :2 * H2] + gh[:, :2 * H2])
        r, z = rz[:, :H2], rz[:, H2:]
        n = jnp.tanh(gi[:, 2 * H2:] + gh[:, 3 * H2:]
                     + r * (gh[:, 2 * H2:3 * H2] + bhn))
        h_new = n + z * (h - n)                             # = (1-z)*n + z*h
        mask = (t >= lo) & (t < hi)                         # pack_padded freeze
        return jnp.where(mask, h_new, h)

    h0 = jnp.zeros((B, H2), jnp.float32)
    # T+1 iterations because of the one-step layer skew. T is tiny here; cap the
    # unroll factor if T ever grows beyond a few dozen steps (vreg pressure).
    h = jax.lax.fori_loop(0, T + 1, step, h0, unroll=True)

    # fc(hn[-1]); wfc rows for the layer-1 half are zero, so no mid-vreg slice.
    out_ref[...] = (jnp.dot(h, wfc_ref[...], preferred_element_type=jnp.float32)
                    + bfc_ref[...]).astype(out_ref.dtype)


def gru_model_forward(x, seq_lens, params):
    """x: (B, T, D) batch-first (like the PyTorch module); seq_lens: (B,) int."""
    B, T, D = x.shape
    H = params["whh1"].shape[-1]
    B_pad = ((B + 7) // 8) * 8            # sublane-align batch (vreg is 8 x 128)
    D_pad = ((D + 127) // 128) * 128      # lane-align the prologue contracting dim
    f32, bf16 = jnp.float32, jnp.bfloat16
    p = params

    # ---- prologue weights: columns [r1 | bi2_r | z1 | bi2_z | n1 | bi2_n] -----
    zDH = jnp.zeros((D, H), f32)
    wih1_big = jnp.concatenate(
        [p["wih1"][0], zDH, p["wih1"][1], zDH, p["wih1"][2], zDH], axis=1)      # (D, 6H)
    wih1_big = jnp.zeros((D_pad, 6 * H), f32).at[:D].set(wih1_big).astype(bf16)
    # r/z biases combined (b_ih + b_hh); n gate keeps only b_ih here (b_hn stays
    # inside the r * (W_hn h + b_hn) term).
    b_big = jnp.concatenate(
        [p["bih1"][0] + p["bhh1"][0], p["bih2"][0] + p["bhh2"][0],
         p["bih1"][1] + p["bhh1"][1], p["bih2"][1] + p["bhh2"][1],
         p["bih1"][2],                p["bih2"][2]], axis=1)                     # (1, 6H)

    # ---- per-step fused weight (2H, 8H): rows [h1 | h2], 128-aligned blocks ----
    # columns: [gh1_r | g2_r | gh1_z | g2_z | gh1_n | gh2_n | 0 | gi2_n]
    zHH = jnp.zeros((H, H), f32)
    w1, w2, wi2 = p["whh1"], p["whh2"], p["wih2"]
    top = jnp.concatenate([w1[0], wi2[0], w1[1], wi2[1], w1[2], zHH,   zHH, wi2[2]], axis=1)
    bot = jnp.concatenate([zHH,   w2[0],  zHH,   w2[1],  zHH,   w2[2], zHH, zHH   ], axis=1)
    wstep = jnp.concatenate([top, bot], axis=0).astype(bf16)                     # (2H, 8H)

    bhn_cat = jnp.concatenate([p["bhh1"][2], p["bhh2"][2]], axis=1)              # (1, 2H)
    wfc_big = jnp.concatenate([jnp.zeros((H, 1), f32), p["wfc"]], axis=0)        # (2H, 1)

    # ---- time-major, sublane/lane-padded bf16 input -----------------------------
    x_pad = jnp.zeros((B_pad, T, D_pad), f32).at[:B, :, :D].set(x.astype(f32))
    x_flat = jnp.transpose(x_pad, (1, 0, 2)).reshape(T * B_pad, D_pad).astype(bf16)
    # padded rows get length 0 -> never update; sliced off below.
    lens = jnp.zeros((B_pad, 1), jnp.int32).at[:B, 0].set(seq_lens.astype(jnp.int32))

    vmem = pl.BlockSpec(memory_space=pltpu.MemorySpace.VMEM)
    out = pl.pallas_call(
        gru_kernel,
        out_shape=jax.ShapeDtypeStruct((B_pad, 1), f32),
        in_specs=[vmem] * 8,
        out_specs=vmem,
        scratch_shapes=[pltpu.VMEM((T * B_pad, 6 * H), jnp.float32)],
        compiler_params=pltpu.CompilerParams(vmem_limit_bytes=32 * 1024 * 1024),
    )(x_flat, lens, wih1_big, b_big, wstep, bhn_cat, wfc_big, p["bfc"])
    return out[:B]


def ref_forward(x, seq_lens, p):
    """Pure-JAX f32 reference mirroring pack_padded_sequence + stacked GRU + fc."""
    B, T, D = x.shape
    H = p["wih1"].shape[-1]
    h1 = jnp.zeros((B, H), jnp.float32)
    h2 = jnp.zeros((B, H), jnp.float32)

    def cell(x, h, wih, whh, bih, bhh):
        r = jax.nn.sigmoid(x @ wih[0] + bih[0] + h @ whh[0] + bhh[0])
        z = jax.nn.sigmoid(x @ wih[1] + bih[1] + h @ whh[1] + bhh[1])
        n = jnp.tanh(x @ wih[2] + bih[2] + r * (h @ whh[2] + bhh[2]))
        return (1.0 - z) * n + z * h

    for t in range(T):
        m = (t < seq_lens)[:, None]
        h1n = cell(x[:, t].astype(jnp.float32), h1,
                   p["wih1"], p["whh1"], p["bih1"], p["bhh1"])
        h2n = cell(h1n, h2, p["wih2"], p["whh2"], p["bih2"], p["bhh2"])
        h1 = jnp.where(m, h1n, h1)
        h2 = jnp.where(m, h2n, h2)
    return h2 @ p["wfc"] + p["bfc"]


def init_params(key, input_dim=22, hidden_dim=64):
    """Deterministic init; PyTorch-style U(-1/sqrt(H), 1/sqrt(H))."""
    H, D = hidden_dim, input_dim
    k = 1.0 / jnp.sqrt(jnp.float32(H))
    names_shapes = [
        ("wih1", (3, D, H)), ("whh1", (3, H, H)), ("bih1", (3, 1, H)), ("bhh1", (3, 1, H)),
        ("wih2", (3, H, H)), ("whh2", (3, H, H)), ("bih2", (3, 1, H)), ("bhh2", (3, 1, H)),
        ("wfc", (H, 1)), ("bfc", (1, 1)),
    ]
    keys = jax.random.split(key, len(names_shapes))
    return {name: jax.random.uniform(kk, shape, jnp.float32, -k, k)
            for kk, (name, shape) in zip(keys, names_shapes)}


if __name__ == "__main__":
    key = jax.random.PRNGKey(0)
    k_x, k_p = jax.random.split(key)

    B, T, D, H = 4, 8, 22, 64
    x = jax.random.normal(k_x, (B, T, D), jnp.float32)
    # pack_padded_sequence default (enforce_sorted=True) requires descending lengths
    seq_lens = jnp.array([8, 6, 5, 3], dtype=jnp.int32)
    params = init_params(k_p, input_dim=D, hidden_dim=H)

    fwd = jax.jit(gru_model_forward)
    out = jax.block_until_ready(fwd(x, seq_lens, params))

    ref = jax.block_until_ready(ref_forward(x, seq_lens, params))
    assert out.shape == (B, 1)
    # bf16 MXU operands with f32 accumulation vs. an exact-f32 reference:
    # compare at bf16-level tolerance (structural bugs would be orders larger).
    assert jnp.allclose(out, ref, atol=5e-3, rtol=2e-2), (out, ref)

    print("KERNEL_OK")
</pallas_src>

<mosaic_0001>
module attributes {stable_mosaic.version = 11 : i64} {
  func.func @gru_kernel(%arg0: memref<64x128xbf16, #tpu.memory_space<vmem>>, %arg1: memref<8x1xi32, #tpu.memory_space<vmem>>, %arg2: memref<128x384xbf16, #tpu.memory_space<vmem>>, %arg3: memref<1x384xf32, #tpu.memory_space<vmem>>, %arg4: memref<128x512xbf16, #tpu.memory_space<vmem>>, %arg5: memref<1x128xf32, #tpu.memory_space<vmem>>, %arg6: memref<128x1xf32, #tpu.memory_space<vmem>>, %arg7: memref<1x1xf32, #tpu.memory_space<vmem>>, %arg8: memref<8x1xf32, #tpu.memory_space<vmem>>, %arg9: memref<64x384xf32, #tpu.memory_space<vmem>>) attributes {dimension_semantics = [], scalar_prefetch = 0 : i64, scratch_operands = 1 : i64, tpu.core_type = #tpu.core_type<tc>} {
    %c0 = arith.constant 0 : index
    %c0_0 = arith.constant 0 : index
    %0 = vector.load %arg0[%c0, %c0_0] : memref<64x128xbf16, #tpu.memory_space<vmem>>, vector<64x128xbf16>
    %c0_1 = arith.constant 0 : index
    %c0_2 = arith.constant 0 : index
    %1 = vector.load %arg2[%c0_1, %c0_2] : memref<128x384xbf16, #tpu.memory_space<vmem>>, vector<128x384xbf16>
    %cst = arith.constant dense<0.000000e+00> : vector<64x384xf32>
    %2 = tpu.matmul %0, %1, %cst {dimension_numbers = #tpu.dot_dimension_numbers<[1], [0], [0], [1], [0, 0, 1, 1], [], []>} : vector<64x128xbf16>, vector<128x384xbf16>, vector<64x384xf32> -> vector<64x384xf32>
    %c0_3 = arith.constant 0 : index
    %c0_4 = arith.constant 0 : index
    %3 = vector.load %arg3[%c0_3, %c0_4] : memref<1x384xf32, #tpu.memory_space<vmem>>, vector<1x384xf32>
    %4 = vector.broadcast %3 : vector<1x384xf32> to vector<64x384xf32>
    %5 = arith.addf %2, %4 : vector<64x384xf32>
    %c0_5 = arith.constant 0 : index
    %c0_6 = arith.constant 0 : index
    %6 = vector.load %arg9[%c0_5, %c0_6] : memref<64x384xf32, #tpu.memory_space<vmem>>, vector<64x384xf32>
    tpu.vector_store %arg9[%c0_5, %c0_6], %5 {strides = array<i32>} : memref<64x384xf32, #tpu.memory_space<vmem>>, vector<64x384xf32>,
    %7 = tpu.iota {dimensions = array<i32: 1>} : vector<8x128xi32>
    %c64_i32 = arith.constant 64 : i32
    %8 = vector.broadcast %c64_i32 : i32 to vector<8x128xi32>
    %9 = arith.cmpi sge, %7, %8 : vector<8x128xi32>
    %10 = arith.extui %9 : vector<8x128xi1> to vector<8x128xi32>
    %c0_7 = arith.constant 0 : index
    %c0_8 = arith.constant 0 : index
    %11 = vector.load %arg1[%c0_7, %c0_8] : memref<8x1xi32, #tpu.memory_space<vmem>>, vector<8x1xi32>
    %12 = vector.broadcast %11 : vector<8x1xi32> to vector<8x128xi32>
    %13 = arith.addi %12, %10 : vector<8x128xi32>
    %c0_9 = arith.constant 0 : index
    %c0_10 = arith.constant 0 : index
    %14 = vector.load %arg5[%c0_9, %c0_10] : memref<1x128xf32, #tpu.memory_space<vmem>>, vector<1x128xf32>
    %15 = vector.shape_cast %14 : vector<1x128xf32> to vector<1x128xf32>
    %16 = vector.broadcast %15 : vector<1x128xf32> to vector<8x128xf32>
    %cst_11 = arith.constant 0.000000e+00 : f32
    %17 = vector.broadcast %cst_11 : f32 to vector<8x128xf32>
    %c0_i32 = arith.constant 0 : i32
    %c7_i32 = arith.constant 7 : i32
    %18 = arith.minsi %c0_i32, %c7_i32 : i32
    %c8_i32 = arith.constant 8 : i32
    %19 = arith.muli %18, %c8_i32 : i32
    %20 = tpu.assume_multiple %19, 8 : i32
    %21 = arith.index_cast %20 : i32 to index
    %c0_12 = arith.constant 0 : index
    %22 = vector.load %arg9[%21, %c0_12] : memref<64x384xf32, #tpu.memory_space<vmem>>, vector<8x384xf32>
    %23 = arith.truncf %17 : vector<8x128xf32> to vector<8x128xbf16>
    %c0_13 = arith.constant 0 : index
    %c0_14 = arith.constant 0 : index
    %24 = vector.load %arg4[%c0_13, %c0_14] : memref<128x512xbf16, #tpu.memory_space<vmem>>, vector<128x512xbf16>
    %cst_15 = arith.constant dense<0.000000e+00> : vector<8x512xf32>
    %25 = tpu.matmul %23, %24, %cst_15 {dimension_numbers = #tpu.dot_dimension_numbers<[1], [0], [0], [1], [0, 0, 1, 1], [], []>} : vector<8x128xbf16>, vector<128x512xbf16>, vector<8x512xf32> -> vector<8x512xf32>
    %26 = vector.extract_strided_slice %22 {offsets = [0, 0], sizes = [8, 256], strides = [1, 1]} : vector<8x384xf32> to vector<8x256xf32>
    %27 = vector.extract_strided_slice %25 {offsets = [0, 0], sizes = [8, 256], strides = [1, 1]} : vector<8x512xf32> to vector<8x256xf32>
    %28 = arith.addf %26, %27 : vector<8x256xf32>
    %29 = arith.negf %28 : vector<8x256xf32>
    %30 = math.exp %29 : vector<8x256xf32>
    %cst_16 = arith.constant 1.000000e+00 : f32
    %31 = vector.broadcast %cst_16 : f32 to vector<8x256xf32>
    %32 = arith.addf %31, %30 : vector<8x256xf32>
    %33 = arith.divf %31, %32 : vector<8x256xf32>
    %34 = vector.extract_strided_slice %33 {offsets = [0, 0], sizes = [8, 128], strides = [1, 1]} : vector<8x256xf32> to vector<8x128xf32>
    %35 = vector.extract_strided_slice %33 {offsets = [0, 128], sizes = [8, 128], strides = [1, 1]} : vector<8x256xf32> to vector<8x128xf32>
    %36 = vector.extract_strided_slice %22 {offsets = [0, 256], sizes = [8, 128], strides = [1, 1]} : vector<8x384xf32> to vector<8x128xf32>
    %37 = vector.extract_strided_slice %25 {offsets = [0, 384], sizes = [8, 128], strides = [1, 1]} : vector<8x512xf32> to vector<8x128xf32>
    %38 = arith.addf %36, %37 : vector<8x128xf32>
    %39 = vector.extract_strided_slice %25 {offsets = [0, 256], sizes = [8, 128], strides = [1, 1]} : vector<8x512xf32> to vector<8x128xf32>
    %40 = arith.addf %39, %16 : vector<8x128xf32>
    %41 = arith.mulf %34, %40 : vector<8x128xf32>
    %42 = arith.addf %38, %41 : vector<8x128xf32>
    %43 = math.tanh %42 : vector<8x128xf32>
    %44 = arith.subf %17, %43 : vector<8x128xf32>
    %45 = arith.mulf %35, %44 : vector<8x128xf32>
    %46 = arith.addf %43, %45 : vector<8x128xf32>
    %47 = vector.broadcast %c0_i32 : i32 to vector<8x128xi32>
    %48 = arith.cmpi sge, %47, %10 : vector<8x128xi32>
    %49 = vector.broadcast %c0_i32 : i32 to vector<8x128xi32>
    %50 = arith.cmpi slt, %49, %13 : vector<8x128xi32>
    %51 = arith.andi %48, %50 : vector<8x128xi1>
    %52 = arith.select %51, %46, %17 : vector<8x128xi1>, vector<8x128xf32>
    %c1_i32 = arith.constant 1 : i32
    %c7_i32_17 = arith.constant 7 : i32
    %53 = arith.minsi %c1_i32, %c7_i32_17 : i32
    %c8_i32_18 = arith.constant 8 : i32
    %54 = arith.muli %53, %c8_i32_18 : i32
    %55 = tpu.assume_multiple %54, 8 : i32
    %56 = arith.index_cast %55 : i32 to index
    %c0_19 = arith.constant 0 : index
    %57 = vector.load %arg9[%56, %c0_19] : memref<64x384xf32, #tpu.memory_space<vmem>>, vector<8x384xf32>
    %58 = arith.truncf %52 : vector<8x128xf32> to vector<8x128xbf16>
    %c0_20 = arith.constant 0 : index
    %c0_21 = arith.constant 0 : index
    %59 = vector.load %arg4[%c0_20, %c0_21] : memref<128x512xbf16, #tpu.memory_space<vmem>>, vector<128x512xbf16>
    %cst_22 = arith.constant dense<0.000000e+00> : vector<8x512xf32>
    %60 = tpu.matmul %58, %59, %cst_22 {dimension_numbers = #tpu.dot_dimension_numbers<[1], [0], [0], [1], [0, 0, 1, 1], [], []>} : vector<8x128xbf16>, vector<128x512xbf16>, vector<8x512xf32> -> vector<8x512xf32>
    %61 = vector.extract_strided_slice %57 {offsets = [0, 0], sizes = [8, 256], strides = [1, 1]} : vector<8x384xf32> to vector<8x256xf32>
    %62 = vector.extract_strided_slice %60 {offsets = [0, 0], sizes = [8, 256], strides = [1, 1]} : vector<8x512xf32> to vector<8x256xf32>
    %63 = arith.addf %61, %62 : vector<8x256xf32>
    %64 = arith.negf %63 : vector<8x256xf32>
    %65 = math.exp %64 : vector<8x256xf32>
    %cst_23 = arith.constant 1.000000e+00 : f32
    %66 = vector.broadcast %cst_23 : f32 to vector<8x256xf32>
    %67 = arith.addf %66, %65 : vector<8x256xf32>
    %68 = arith.divf %66, %67 : vector<8x256xf32>
    %69 = vector.extract_strided_slice %68 {offsets = [0, 0], sizes = [8, 128], strides = [1, 1]} : vector<8x256xf32> to vector<8x128xf32>
    %70 = vector.extract_strided_slice %68 {offsets = [0, 128], sizes = [8, 128], strides = [1, 1]} : vector<8x256xf32> to vector<8x128xf32>
    %71 = vector.extract_strided_slice %57 {offsets = [0, 256], sizes = [8, 128], strides = [1, 1]} : vector<8x384xf32> to vector<8x128xf32>
    %72 = vector.extract_strided_slice %60 {offsets = [0, 384], sizes = [8, 128], strides = [1, 1]} : vector<8x512xf32> to vector<8x128xf32>
    %73 = arith.addf %71, %72 : vector<8x128xf32>
    %74 = vector.extract_strided_slice %60 {offsets = [0, 256], sizes = [8, 128], strides = [1, 1]} : vector<8x512xf32> to vector<8x128xf32>
    %75 = arith.addf %74, %16 : vector<8x128xf32>
    %76 = arith.mulf %69, %75 : vector<8x128xf32>
    %77 = arith.addf %73, %76 : vector<8x128xf32>
    %78 = math.tanh %77 : vector<8x128xf32>
    %79 = arith.subf %52, %78 : vector<8x128xf32>
    %80 = arith.mulf %70, %79 : vector<8x128xf32>
    %81 = arith.addf %78, %80 : vector<8x128xf32>
    %82 = vector.broadcast %c1_i32 : i32 to vector<8x128xi32>
    %83 = arith.cmpi sge, %82, %10 : vector<8x128xi32>
    %84 = vector.broadcast %c1_i32 : i32 to vector<8x128xi32>
    %85 = arith.cmpi slt, %84, %13 : vector<8x128xi32>
    %86 = arith.andi %83, %85 : vector<8x128xi1>
    %87 = arith.select %86, %81, %52 : vector<8x128xi1>, vector<8x128xf32>
    %c2_i32 = arith.constant 2 : i32
    %c7_i32_24 = arith.constant 7 : i32
    %88 = arith.minsi %c2_i32, %c7_i32_24 : i32
    %c8_i32_25 = arith.constant 8 : i32
    %89 = arith.muli %88, %c8_i32_25 : i32
    %90 = tpu.assume_multiple %89, 8 : i32
    %91 = arith.index_cast %90 : i32 to index
    %c0_26 = arith.constant 0 : index
    %92 = vector.load %arg9[%91, %c0_26] : memref<64x384xf32, #tpu.memory_space<vmem>>, vector<8x384xf32>
    %93 = arith.truncf %87 : vector<8x128xf32> to vector<8x128xbf16>
    %c0_27 = arith.constant 0 : index
    %c0_28 = arith.constant 0 : index
    %94 = vector.load %arg4[%c0_27, %c0_28] : memref<128x512xbf16, #tpu.memory_space<vmem>>, vector<128x512xbf16>
    %cst_29 = arith.constant dense<0.000000e+00> : vector<8x512xf32>
    %95 = tpu.matmul %93, %94, %cst_29 {dimension_numbers = #tpu.dot_dimension_numbers<[1], [0], [0], [1], [0, 0, 1, 1], [], []>} : vector<8x128xbf16>, vector<128x512xbf16>, vector<8x512xf32> -> vector<8x512xf32>
    %96 = vector.extract_strided_slice %92 {offsets = [0, 0], sizes = [8, 256], strides = [1, 1]} : vector<8x384xf32> to vector<8x256xf32>
    %97 = vector.extract_strided_slice %95 {offsets = [0, 0], sizes = [8, 256], strides = [1, 1]} : vector<8x512xf32> to vector<8x256xf32>
    %98 = arith.addf %96, %97 : vector<8x256xf32>
    %99 = arith.negf %98 : vector<8x256xf32>
    %100 = math.exp %99 : vector<8x256xf32>
    %cst_30 = arith.constant 1.000000e+00 : f32
    %101 = vector.broadcast %cst_30 : f32 to vector<8x256xf32>
    %102 = arith.addf %101, %100 : vector<8x256xf32>
    %103 = arith.divf %101, %102 : vector<8x256xf32>
    %104 = vector.extract_strided_slice %103 {offsets = [0, 0], sizes = [8, 128], strides = [1, 1]} : vector<8x256xf32> to vector<8x128xf32>
    %105 = vector.extract_strided_slice %103 {offsets = [0, 128], sizes = [8, 128], strides = [1, 1]} : vector<8x256xf32> to vector<8x128xf32>
    %106 = vector.extract_strided_slice %92 {offsets = [0, 256], sizes = [8, 128], strides = [1, 1]} : vector<8x384xf32> to vector<8x128xf32>
    %107 = vector.extract_strided_slice %95 {offsets = [0, 384], sizes = [8, 128], strides = [1, 1]} : vector<8x512xf32> to vector<8x128xf32>
    %108 = arith.addf %106, %107 : vector<8x128xf32>
    %109 = vector.extract_strided_slice %95 {offsets = [0, 256], sizes = [8, 128], strides = [1, 1]} : vector<8x512xf32> to vector<8x128xf32>
    %110 = arith.addf %109, %16 : vector<8x128xf32>
    %111 = arith.mulf %104, %110 : vector<8x128xf32>
    %112 = arith.addf %108, %111 : vector<8x128xf32>
    %113 = math.tanh %112 : vector<8x128xf32>
    %114 = arith.subf %87, %113 : vector<8x128xf32>
    %115 = arith.mulf %105, %114 : vector<8x128xf32>
    %116 = arith.addf %113, %115 : vector<8x128xf32>
    %117 = vector.broadcast %c2_i32 : i32 to vector<8x128xi32>
    %118 = arith.cmpi sge, %117, %10 : vector<8x128xi32>
    %119 = vector.broadcast %c2_i32 : i32 to vector<8x128xi32>
    %120 = arith.cmpi slt, %119, %13 : vector<8x128xi32>
    %121 = arith.andi %118, %120 : vector<8x128xi1>
    %122 = arith.select %121, %116, %87 : vector<8x128xi1>, vector<8x128xf32>
    %c3_i32 = arith.constant 3 : i32
    %c7_i32_31 = arith.constant 7 : i32
    %123 = arith.minsi %c3_i32, %c7_i32_31 : i32
    %c8_i32_32 = arith.constant 8 : i32
    %124 = arith.muli %123, %c8_i32_32 : i32
    %125 = tpu.assume_multiple %124, 8 : i32
    %126 = arith.index_cast %125 : i32 to index
    %c0_33 = arith.constant 0 : index
    %127 = vector.load %arg9[%126, %c0_33] : memref<64x384xf32, #tpu.memory_space<vmem>>, vector<8x384xf32>
    %128 = arith.truncf %122 : vector<8x128xf32> to vector<8x128xbf16>
    %c0_34 = arith.constant 0 : index
    %c0_35 = arith.constant 0 : index
    %129 = vector.load %arg4[%c0_34, %c0_35] : memref<128x512xbf16, #tpu.memory_space<vmem>>, vector<128x512xbf16>
    %cst_36 = arith.constant dense<0.000000e+00> : vector<8x512xf32>
    %130 = tpu.matmul %128, %129, %cst_36 {dimension_numbers = #tpu.dot_dimension_numbers<[1], [0], [0], [1], [0, 0, 1, 1], [], []>} : vector<8x128xbf16>, vector<128x512xbf16>, vector<8x512xf32> -> vector<8x512xf32>
    %131 = vector.extract_strided_slice %127 {offsets = [0, 0], sizes = [8, 256], strides = [1, 1]} : vector<8x384xf32> to vector<8x256xf32>
    %132 = vector.extract_strided_slice %130 {offsets = [0, 0], sizes = [8, 256], strides = [1, 1]} : vector<8x512xf32> to vector<8x256xf32>
    %133 = arith.addf %131, %132 : vector<8x256xf32>
    %134 = arith.negf %133 : vector<8x256xf32>
    %135 = math.exp %134 : vector<8x256xf32>
    %cst_37 = arith.constant 1.000000e+00 : f32
    %136 = vector.broadcast %cst_37 : f32 to vector<8x256xf32>
    %137 = arith.addf %136, %135 : vector<8x256xf32>
    %138 = arith.divf %136, %137 : vector<8x256xf32>
    %139 = vector.extract_strided_slice %138 {offsets = [0, 0], sizes = [8, 128], strides = [1, 1]} : vector<8x256xf32> to vector<8x128xf32>
    %140 = vector.extract_strided_slice %138 {offsets = [0, 128], sizes = [8, 128], strides = [1, 1]} : vector<8x256xf32> to vector<8x128xf32>
    %141 = vector.extract_strided_slice %127 {offsets = [0, 256], sizes = [8, 128], strides = [1, 1]} : vector<8x384xf32> to vector<8x128xf32>
    %142 = vector.extract_strided_slice %130 {offsets = [0, 384], sizes = [8, 128], strides = [1, 1]} : vector<8x512xf32> to vector<8x128xf32>
    %143 = arith.addf %141, %142 : vector<8x128xf32>
    %144 = vector.extract_strided_slice %130 {offsets = [0, 256], sizes = [8, 128], strides = [1, 1]} : vector<8x512xf32> to vector<8x128xf32>
    %145 = arith.addf %144, %16 : vector<8x128xf32>
    %146 = arith.mulf %139, %145 : vector<8x128xf32>
    %147 = arith.addf %143, %146 : vector<8x128xf32>
    %148 = math.tanh %147 : vector<8x128xf32>
    %149 = arith.subf %122, %148 : vector<8x128xf32>
    %150 = arith.mulf %140, %149 : vector<8x128xf32>
    %151 = arith.addf %148, %150 : vector<8x128xf32>
    %152 = vector.broadcast %c3_i32 : i32 to vector<8x128xi32>
    %153 = arith.cmpi sge, %152, %10 : vector<8x128xi32>
    %154 = vector.broadcast %c3_i32 : i32 to vector<8x128xi32>
    %155 = arith.cmpi slt, %154, %13 : vector<8x128xi32>
    %156 = arith.andi %153, %155 : vector<8x128xi1>
    %157 = arith.select %156, %151, %122 : vector<8x128xi1>, vector<8x128xf32>
    %c4_i32 = arith.constant 4 : i32
    %c7_i32_38 = arith.constant 7 : i32
    %158 = arith.minsi %c4_i32, %c7_i32_38 : i32
    %c8_i32_39 = arith.constant 8 : i32
    %159 = arith.muli %158, %c8_i32_39 : i32
    %160 = tpu.assume_multiple %159, 8 : i32
    %161 = arith.index_cast %160 : i32 to index
    %c0_40 = arith.constant 0 : index
    %162 = vector.load %arg9[%161, %c0_40] : memref<64x384xf32, #tpu.memory_space<vmem>>, vector<8x384xf32>
    %163 = arith.truncf %157 : vector<8x128xf32> to vector<8x128xbf16>
    %c0_41 = arith.constant 0 : index
    %c0_42 = arith.constant 0 : index
    %164 = vector.load %arg4[%c0_41, %c0_42] : memref<128x512xbf16, #tpu.memory_space<vmem>>, vector<128x512xbf16>
    %cst_43 = arith.constant dense<0.000000e+00> : vector<8x512xf32>
    %165 = tpu.matmul %163, %164, %cst_43 {dimension_numbers = #tpu.dot_dimension_numbers<[1], [0], [0], [1], [0, 0, 1, 1], [], []>} : vector<8x128xbf16>, vector<128x512xbf16>, vector<8x512xf32> -> vector<8x512xf32>
    %166 = vector.extract_strided_slice %162 {offsets = [0, 0], sizes = [8, 256], strides = [1, 1]} : vector<8x384xf32> to vector<8x256xf32>
    %167 = vector.extract_strided_slice %165 {offsets = [0, 0], sizes = [8, 256], strides = [1, 1]} : vector<8x512xf32> to vector<8x256xf32>
    %168 = arith.addf %166, %167 : vector<8x256xf32>
    %169 = arith.negf %168 : vector<8x256xf32>
    %170 = math.exp %169 : vector<8x256xf32>
    %cst_44 = arith.constant 1.000000e+00 : f32
    %171 = vector.broadcast %cst_44 : f32 to vector<8x256xf32>
    %172 = arith.addf %171, %170 : vector<8x256xf32>
    %173 = arith.divf %171, %172 : vector<8x256xf32>
    %174 = vector.extract_strided_slice %173 {offsets = [0, 0], sizes = [8, 128], strides = [1, 1]} : vector<8x256xf32> to vector<8x128xf32>
    %175 = vector.extract_strided_slice %173 {offsets = [0, 128], sizes = [8, 128], strides = [1, 1]} : vector<8x256xf32> to vector<8x128xf32>
    %176 = vector.extract_strided_slice %162 {offsets = [0, 256], sizes = [8, 128], strides = [1, 1]} : vector<8x384xf32> to vector<8x128xf32>
    %177 = vector.extract_strided_slice %165 {offsets = [0, 384], sizes = [8, 128], strides = [1, 1]} : vector<8x512xf32> to vector<8x128xf32>
    %178 = arith.addf %176, %177 : vector<8x128xf32>
    %179 = vector.extract_strided_slice %165 {offsets = [0, 256], sizes = [8, 128], strides = [1, 1]} : vector<8x512xf32> to vector<8x128xf32>
    %180 = arith.addf %179, %16 : vector<8x128xf32>
    %181 = arith.mulf %174, %180 : vector<8x128xf32>
    %182 = arith.addf %178, %181 : vector<8x128xf32>
    %183 = math.tanh %182 : vector<8x128xf32>
    %184 = arith.subf %157, %183 : vector<8x128xf32>
    %185 = arith.mulf %175, %184 : vector<8x128xf32>
    %186 = arith.addf %183, %185 : vector<8x128xf32>
    %187 = vector.broadcast %c4_i32 : i32 to vector<8x128xi32>
    %188 = arith.cmpi sge, %187, %10 : vector<8x128xi32>
    %189 = vector.broadcast %c4_i32 : i32 to vector<8x128xi32>
    %190 = arith.cmpi slt, %189, %13 : vector<8x128xi32>
    %191 = arith.andi %188, %190 : vector<8x128xi1>
    %192 = arith.select %191, %186, %157 : vector<8x128xi1>, vector<8x128xf32>
    %c5_i32 = arith.constant 5 : i32
    %c7_i32_45 = arith.constant 7 : i32
    %193 = arith.minsi %c5_i32, %c7_i32_45 : i32
    %c8_i32_46 = arith.constant 8 : i32
    %194 = arith.muli %193, %c8_i32_46 : i32
    %195 = tpu.assume_multiple %194, 8 : i32
    %196 = arith.index_cast %195 : i32 to index
    %c0_47 = arith.constant 0 : index
    %197 = vector.load %arg9[%196, %c0_47] : memref<64x384xf32, #tpu.memory_space<vmem>>, vector<8x384xf32>
    %198 = arith.truncf %192 : vector<8x128xf32> to vector<8x128xbf16>
    %c0_48 = arith.constant 0 : index
    %c0_49 = arith.constant 0 : index
    %199 = vector.load %arg4[%c0_48, %c0_49] : memref<128x512xbf16, #tpu.memory_space<vmem>>, vector<128x512xbf16>
    %cst_50 = arith.constant dense<0.000000e+00> : vector<8x512xf32>
    %200 = tpu.matmul %198, %199, %cst_50 {dimension_numbers = #tpu.dot_dimension_numbers<[1], [0], [0], [1], [0, 0, 1, 1], [], []>} : vector<8x128xbf16>, vector<128x512xbf16>, vector<8x512xf32> -> vector<8x512xf32>
    %201 = vector.extract_strided_slice %197 {offsets = [0, 0], sizes = [8, 256], strides = [1, 1]} : vector<8x384xf32> to vector<8x256xf32>
    %202 = vector.extract_strided_slice %200 {offsets = [0, 0], sizes = [8, 256], strides = [1, 1]} : vector<8x512xf32> to vector<8x256xf32>
    %203 = arith.addf %201, %202 : vector<8x256xf32>
    %204 = arith.negf %203 : vector<8x256xf32>
    %205 = math.exp %204 : vector<8x256xf32>
    %cst_51 = arith.constant 1.000000e+00 : f32
    %206 = vector.broadcast %cst_51 : f32 to vector<8x256xf32>
    %207 = arith.addf %206, %205 : vector<8x256xf32>
    %208 = arith.divf %206, %207 : vector<8x256xf32>
    %209 = vector.extract_strided_slice %208 {offsets = [0, 0], sizes = [8, 128], strides = [1, 1]} : vector<8x256xf32> to vector<8x128xf32>
    %210 = vector.extract_strided_slice %208 {offsets = [0, 128], sizes = [8, 128], strides = [1, 1]} : vector<8x256xf32> to vector<8x128xf32>
    %211 = vector.extract_strided_slice %197 {offsets = [0, 256], sizes = [8, 128], strides = [1, 1]} : vector<8x384xf32> to vector<8x128xf32>
    %212 = vector.extract_strided_slice %200 {offsets = [0, 384], sizes = [8, 128], strides = [1, 1]} : vector<8x512xf32> to vector<8x128xf32>
    %213 = arith.addf %211, %212 : vector<8x128xf32>
    %214 = vector.extract_strided_slice %200 {offsets = [0, 256], sizes = [8, 128], strides = [1, 1]} : vector<8x512xf32> to vector<8x128xf32>
    %215 = arith.addf %214, %16 : vector<8x128xf32>
    %216 = arith.mulf %209, %215 : vector<8x128xf32>
    %217 = arith.addf %213, %216 : vector<8x128xf32>
    %218 = math.tanh %217 : vector<8x128xf32>
    %219 = arith.subf %192, %218 : vector<8x128xf32>
    %220 = arith.mulf %210, %219 : vector<8x128xf32>
    %221 = arith.addf %218, %220 : vector<8x128xf32>
    %222 = vector.broadcast %c5_i32 : i32 to vector<8x128xi32>
    %223 = arith.cmpi sge, %222, %10 : vector<8x128xi32>
    %224 = vector.broadcast %c5_i32 : i32 to vector<8x128xi32>
    %225 = arith.cmpi slt, %224, %13 : vector<8x128xi32>
    %226 = arith.andi %223, %225 : vector<8x128xi1>
    %227 = arith.select %226, %221, %192 : vector<8x128xi1>, vector<8x128xf32>
    %c6_i32 = arith.constant 6 : i32
    %c7_i32_52 = arith.constant 7 : i32
    %228 = arith.minsi %c6_i32, %c7_i32_52 : i32
    %c8_i32_53 = arith.constant 8 : i32
    %229 = arith.muli %228, %c8_i32_53 : i32
    %230 = tpu.assume_multiple %229, 8 : i32
    %231 = arith.index_cast %230 : i32 to index
    %c0_54 = arith.constant 0 : index
    %232 = vector.load %arg9[%231, %c0_54] : memref<64x384xf32, #tpu.memory_space<vmem>>, vector<8x384xf32>
    %233 = arith.truncf %227 : vector<8x128xf32> to vector<8x128xbf16>
    %c0_55 = arith.constant 0 : index
    %c0_56 = arith.constant 0 : index
    %234 = vector.load %arg4[%c0_55, %c0_56] : memref<128x512xbf16, #tpu.memory_space<vmem>>, vector<128x512xbf16>
    %cst_57 = arith.constant dense<0.000000e+00> : vector<8x512xf32>
    %235 = tpu.matmul %233, %234, %cst_57 {dimension_numbers = #tpu.dot_dimension_numbers<[1], [0], [0], [1], [0, 0, 1, 1], [], []>} : vector<8x128xbf16>, vector<128x512xbf16>, vector<8x512xf32> -> vector<8x512xf32>
    %236 = vector.extract_strided_slice %232 {offsets = [0, 0], sizes = [8, 256], strides = [1, 1]} : vector<8x384xf32> to vector<8x256xf32>
    %237 = vector.extract_strided_slice %235 {offsets = [0, 0], sizes = [8, 256], strides = [1, 1]} : vector<8x512xf32> to vector<8x256xf32>
    %238 = arith.addf %236, %237 : vector<8x256xf32>
    %239 = arith.negf %238 : vector<8x256xf32>
    %240 = math.exp %239 : vector<8x256xf32>
    %cst_58 = arith.constant 1.000000e+00 : f32
    %241 = vector.broadcast %cst_58 : f32 to vector<8x256xf32>
    %242 = arith.addf %241, %240 : vector<8x256xf32>
    %243 = arith.divf %241, %242 : vector<8x256xf32>
    %244 = vector.extract_strided_slice %243 {offsets = [0, 0], sizes = [8, 128], strides = [1, 1]} : vector<8x256xf32> to vector<8x128xf32>
    %245 = vector.extract_strided_slice %243 {offsets = [0, 128], sizes = [8, 128], strides = [1, 1]} : vector<8x256xf32> to vector<8x128xf32>
    %246 = vector.extract_strided_slice %232 {offsets = [0, 256], sizes = [8, 128], strides = [1, 1]} : vector<8x384xf32> to vector<8x128xf32>
    %247 = vector.extract_strided_slice %235 {offsets = [0, 384], sizes = [8, 128], strides = [1, 1]} : vector<8x512xf32> to vector<8x128xf32>
    %248 = arith.addf %246, %247 : vector<8x128xf32>
    %249 = vector.extract_strided_slice %235 {offsets = [0, 256], sizes = [8, 128], strides = [1, 1]} : vector<8x512xf32> to vector<8x128xf32>
    %250 = arith.addf %249, %16 : vector<8x128xf32>
    %251 = arith.mulf %244, %250 : vector<8x128xf32>
    %252 = arith.addf %248, %251 : vector<8x128xf32>
    %253 = math.tanh %252 : vector<8x128xf32>
    %254 = arith.subf %227, %253 : vector<8x128xf32>
    %255 = arith.mulf %245, %254 : vector<8x128xf32>
    %256 = arith.addf %253, %255 : vector<8x128xf32>
    %257 = vector.broadcast %c6_i32 : i32 to vector<8x128xi32>
    %258 = arith.cmpi sge, %257, %10 : vector<8x128xi32>
    %259 = vector.broadcast %c6_i32 : i32 to vector<8x128xi32>
    %260 = arith.cmpi slt, %259, %13 : vector<8x128xi32>
    %261 = arith.andi %258, %260 : vector<8x128xi1>
    %262 = arith.select %261, %256, %227 : vector<8x128xi1>, vector<8x128xf32>
    %c7_i32_59 = arith.constant 7 : i32
    %c7_i32_60 = arith.constant 7 : i32
    %263 = arith.minsi %c7_i32_59, %c7_i32_60 : i32
    %c8_i32_61 = arith.constant 8 : i32
    %264 = arith.muli %263, %c8_i32_61 : i32
    %265 = tpu.assume_multiple %264, 8 : i32
    %266 = arith.index_cast %265 : i32 to index
    %c0_62 = arith.constant 0 : index
    %267 = vector.load %arg9[%266, %c0_62] : memref<64x384xf32, #tpu.memory_space<vmem>>, vector<8x384xf32>
    %268 = arith.truncf %262 : vector<8x128xf32> to vector<8x128xbf16>
    %c0_63 = arith.constant 0 : index
    %c0_64 = arith.constant 0 : index
    %269 = vector.load %arg4[%c0_63, %c0_64] : memref<128x512xbf16, #tpu.memory_space<vmem>>, vector<128x512xbf16>
    %cst_65 = arith.constant dense<0.000000e+00> : vector<8x512xf32>
    %270 = tpu.matmul %268, %269, %cst_65 {dimension_numbers = #tpu.dot_dimension_numbers<[1], [0], [0], [1], [0, 0, 1, 1], [], []>} : vector<8x128xbf16>, vector<128x512xbf16>, vector<8x512xf32> -> vector<8x512xf32>
    %271 = vector.extract_strided_slice %267 {offsets = [0, 0], sizes = [8, 256], strides = [1, 1]} : vector<8x384xf32> to vector<8x256xf32>
    %272 = vector.extract_strided_slice %270 {offsets = [0, 0], sizes = [8, 256], strides = [1, 1]} : vector<8x512xf32> to vector<8x256xf32>
    %273 = arith.addf %271, %272 : vector<8x256xf32>
    %274 = arith.negf %273 : vector<8x256xf32>
    %275 = math.exp %274 : vector<8x256xf32>
    %cst_66 = arith.constant 1.000000e+00 : f32
    %276 = vector.broadcast %cst_66 : f32 to vector<8x256xf32>
    %277 = arith.addf %276, %275 : vector<8x256xf32>
    %278 = arith.divf %276, %277 : vector<8x256xf32>
    %279 = vector.extract_strided_slice %278 {offsets = [0, 0], sizes = [8, 128], strides = [1, 1]} : vector<8x256xf32> to vector<8x128xf32>
    %280 = vector.extract_strided_slice %278 {offsets = [0, 128], sizes = [8, 128], strides = [1, 1]} : vector<8x256xf32> to vector<8x128xf32>
    %281 = vector.extract_strided_slice %267 {offsets = [0, 256], sizes = [8, 128], strides = [1, 1]} : vector<8x384xf32> to vector<8x128xf32>
    %282 = vector.extract_strided_slice %270 {offsets = [0, 384], sizes = [8, 128], strides = [1, 1]} : vector<8x512xf32> to vector<8x128xf32>
    %283 = arith.addf %281, %282 : vector<8x128xf32>
    %284 = vector.extract_strided_slice %270 {offsets = [0, 256], sizes = [8, 128], strides = [1, 1]} : vector<8x512xf32> to vector<8x128xf32>
    %285 = arith.addf %284, %16 : vector<8x128xf32>
    %286 = arith.mulf %279, %285 : vector<8x128xf32>
    %287 = arith.addf %283, %286 : vector<8x128xf32>
    %288 = math.tanh %287 : vector<8x128xf32>
    %289 = arith.subf %262, %288 : vector<8x128xf32>
    %290 = arith.mulf %280, %289 : vector<8x128xf32>
    %291 = arith.addf %288, %290 : vector<8x128xf32>
    %292 = vector.broadcast %c7_i32_59 : i32 to vector<8x128xi32>
    %293 = arith.cmpi sge, %292, %10 : vector<8x128xi32>
    %294 = vector.broadcast %c7_i32_59 : i32 to vector<8x128xi32>
    %295 = arith.cmpi slt, %294, %13 : vector<8x128xi32>
    %296 = arith.andi %293, %295 : vector<8x128xi1>
    %297 = arith.select %296, %291, %262 : vector<8x128xi1>, vector<8x128xf32>
    %c8_i32_67 = arith.constant 8 : i32
    %c7_i32_68 = arith.constant 7 : i32
    %298 = arith.minsi %c8_i32_67, %c7_i32_68 : i32
    %c8_i32_69 = arith.constant 8 : i32
    %299 = arith.muli %298, %c8_i32_69 : i32
    %300 = tpu.assume_multiple %299, 8 : i32
    %301 = arith.index_cast %300 : i32 to index
    %c0_70 = arith.constant 0 : index
    %302 = vector.load %arg9[%301, %c0_70] : memref<64x384xf32, #tpu.memory_space<vmem>>, vector<8x384xf32>
    %303 = arith.truncf %297 : vector<8x128xf32> to vector<8x128xbf16>
    %c0_71 = arith.constant 0 : index
    %c0_72 = arith.constant 0 : index
    %304 = vector.load %arg4[%c0_71, %c0_72] : memref<128x512xbf16, #tpu.memory_space<vmem>>, vector<128x512xbf16>
    %cst_73 = arith.constant dense<0.000000e+00> : vector<8x512xf32>
    %305 = tpu.matmul %303, %304, %cst_73 {dimension_numbers = #tpu.dot_dimension_numbers<[1], [0], [0], [1], [0, 0, 1, 1], [], []>} : vector<8x128xbf16>, vector<128x512xbf16>, vector<8x512xf32> -> vector<8x512xf32>
    %306 = vector.extract_strided_slice %302 {offsets = [0, 0], sizes = [8, 256], strides = [1, 1]} : vector<8x384xf32> to vector<8x256xf32>
    %307 = vector.extract_strided_slice %305 {offsets = [0, 0], sizes = [8, 256], strides = [1, 1]} : vector<8x512xf32> to vector<8x256xf32>
    %308 = arith.addf %306, %307 : vector<8x256xf32>
    %309 = arith.negf %308 : vector<8x256xf32>
    %310 = math.exp %309 : vector<8x256xf32>
    %cst_74 = arith.constant 1.000000e+00 : f32
    %311 = vector.broadcast %cst_74 : f32 to vector<8x256xf32>
    %312 = arith.addf %311, %310 : vector<8x256xf32>
    %313 = arith.divf %311, %312 : vector<8x256xf32>
    %314 = vector.extract_strided_slice %313 {offsets = [0, 0], sizes = [8, 128], strides = [1, 1]} : vector<8x256xf32> to vector<8x128xf32>
    %315 = vector.extract_strided_slice %313 {offsets = [0, 128], sizes = [8, 128], strides = [1, 1]} : vector<8x256xf32> to vector<8x128xf32>
    %316 = vector.extract_strided_slice %302 {offsets = [0, 256], sizes = [8, 128], strides = [1, 1]} : vector<8x384xf32> to vector<8x128xf32>
    %317 = vector.extract_strided_slice %305 {offsets = [0, 384], sizes = [8, 128], strides = [1, 1]} : vector<8x512xf32> to vector<8x128xf32>
    %318 = arith.addf %316, %317 : vector<8x128xf32>
    %319 = vector.extract_strided_slice %305 {offsets = [0, 256], sizes = [8, 128], strides = [1, 1]} : vector<8x512xf32> to vector<8x128xf32>
    %320 = arith.addf %319, %16 : vector<8x128xf32>
    %321 = arith.mulf %314, %320 : vector<8x128xf32>
    %322 = arith.addf %318, %321 : vector<8x128xf32>
    %323 = math.tanh %322 : vector<8x128xf32>
    %324 = arith.subf %297, %323 : vector<8x128xf32>
    %325 = arith.mulf %315, %324 : vector<8x128xf32>
    %326 = arith.addf %323, %325 : vector<8x128xf32>
    %327 = vector.broadcast %c8_i32_67 : i32 to vector<8x128xi32>
    %328 = arith.cmpi sge, %327, %10 : vector<8x128xi32>
    %329 = vector.broadcast %c8_i32_67 : i32 to vector<8x128xi32>
    %330 = arith.cmpi slt, %329, %13 : vector<8x128xi32>
    %331 = arith.andi %328, %330 : vector<8x128xi1>
    %332 = arith.select %331, %326, %297 : vector<8x128xi1>, vector<8x128xf32>
    %c9_i32 = arith.constant 9 : i32
    %c0_75 = arith.constant 0 : index
    %c0_76 = arith.constant 0 : index
    %333 = vector.load %arg6[%c0_75, %c0_76] : memref<128x1xf32, #tpu.memory_space<vmem>>, vector<128x1xf32>
    %cst_77 = arith.constant dense<0.000000e+00> : vector<8x1xf32>
    %334 = tpu.matmul %332, %333, %cst_77 {dimension_numbers = #tpu.dot_dimension_numbers<[1], [0], [0], [1], [0, 0, 1, 1], [], []>} : vector<8x128xf32>, vector<128x1xf32>, vector<8x1xf32> -> vector<8x1xf32>
    %c0_78 = arith.constant 0 : index
    %c0_79 = arith.constant 0 : index
    %335 = vector.load %arg7[%c0_78, %c0_79] : memref<1x1xf32, #tpu.memory_space<vmem>>, vector<1x1xf32>
    %336 = vector.broadcast %335 : vector<1x1xf32> to vector<8x1xf32>
    %337 = arith.addf %334, %336 : vector<8x1xf32>
    %c0_80 = arith.constant 0 : index
    %c0_81 = arith.constant 0 : index
    %338 = vector.load %arg8[%c0_80, %c0_81] : memref<8x1xf32, #tpu.memory_space<vmem>>, vector<8x1xf32>
    tpu.vector_store %arg8[%c0_80, %c0_81], %337 {strides = array<i32>} : memref<8x1xf32, #tpu.memory_space<vmem>>, vector<8x1xf32>,
    return
  }
}

</mosaic_0001>

<llo_original>
// kernel: gru_model_forward.1
$region0: #{gru_model_forward.1}
  #allocation0 [shape = 'u32[]', space=smem, size = 0x4, offset = 0x4, fixed_abs, tag = 'smem constant byte address 0x4 - core index']
  #allocation1 [shape = 'u32[144,128]{1,0:T(1,128)}', space=vmem, size = 0x12000, scoped, tag = 'internal scratch']
  #allocation2 [shape = 'f32[64,384]{1,0:T(8,128)}', space=vmem, size = 0x18000, scoped, tag = 'scratch operand']
  #allocation3 [shape = 'f32[1,1]{1,0:T(1,128)S(1)}', space=vmem, size = 0x200, scoped, tag = 'scoped memory for gru_model_forward.1']
  %s0 = inlined_call_operand.vmem [shape: bf16[64,128], index: 0, kind: input, shape index: {}]
  %s1 = inlined_call_operand.vmem [shape: s32[8,1], index: 1, kind: input, shape index: {}]
  %s2 = inlined_call_operand.vmem [shape: bf16[128,384], index: 2, kind: input, shape index: {}]
  %s3 = inlined_call_operand.vmem [shape: f32[1,384], index: 3, kind: input, shape index: {}]
  %s4 = inlined_call_operand.vmem [shape: bf16[128,512], index: 4, kind: input, shape index: {}]
  %s5 = inlined_call_operand.vmem [shape: f32[1,128], index: 5, kind: input, shape index: {}]
  %s6 = inlined_call_operand.vmem [shape: f32[128,1], index: 6, kind: input, shape index: {}]
  %s7 = inlined_call_operand.<no memory space> [shape: f32[1,1], index: 7, kind: input, shape index: {}]
  %s8 = inlined_call_operand.vmem [shape: f32[8,1], index: 8, kind: output, shape index: {}]
  %s9 = sld [smem:[#allocation0]]
  $region42: #{gru_model_forward.1} parent=0
    _
  %s11 = ssub.s32 1, %s9
  %s12 = scalar_select 0, %s11, %s9
  %v13 = vstv %s7
  %14 = vst [vmem:[#allocation3] sm:$0x1] %v13
  // Predicated region
  $region2: #{gru_model_forward.1} parent=0 // pred_check
    _
  $region3: #{gru_model_forward.1} parent=0 // pred_check_branch
    %16 = sbr.rel (0) target = $region5
  $region4: #{gru_model_forward.1} parent=0 // pred_region
    _
  $region5: #{gru_model_forward.1} parent=0 // pred_fallthru
    _
  // Predicated region
  $region6: #{gru_model_forward.1} parent=0 // pred_check
    _
  $region7: #{gru_model_forward.1} parent=0 // pred_check_branch
    %18 = sbr.rel (0) target = $region9
  $region8: #{gru_model_forward.1} parent=0 // pred_region
    _
  $region9: #{gru_model_forward.1} parent=0 // pred_fallthru
    _
  // Predicated region
  $region10: #{gru_model_forward.1} parent=0 // pred_check
    _
  $region11: #{gru_model_forward.1} parent=0 // pred_check_branch
    %20 = sbr.rel (0) target = $region13
  $region12: #{gru_model_forward.1} parent=0 // pred_region
    _
  $region13: #{gru_model_forward.1} parent=0 // pred_fallthru
    _
  // Predicated region
  $region14: #{gru_model_forward.1} parent=0 // pred_check
    _
  $region15: #{gru_model_forward.1} parent=0 // pred_check_branch
    %22 = sbr.rel (0) target = $region17
  $region16: #{gru_model_forward.1} parent=0 // pred_region
    _
  $region17: #{gru_model_forward.1} parent=0 // pred_fallthru
    _
  // Predicated region
  $region18: #{gru_model_forward.1} parent=0 // pred_check
    _
  $region19: #{gru_model_forward.1} parent=0 // pred_check_branch
    %24 = sbr.rel (0) target = $region21
  $region20: #{gru_model_forward.1} parent=0 // pred_region
    _
  $region21: #{gru_model_forward.1} parent=0 // pred_fallthru
    _
  // Predicated region
  $region22: #{gru_model_forward.1} parent=0 // pred_check
    _
  $region23: #{gru_model_forward.1} parent=0 // pred_check_branch
    %26 = sbr.rel (0) target = $region25
  $region24: #{gru_model_forward.1} parent=0 // pred_region
    _
  $region25: #{gru_model_forward.1} parent=0 // pred_fallthru
    _
  // Predicated region
  $region26: #{gru_model_forward.1} parent=0 // pred_check
    _
  $region27: #{gru_model_forward.1} parent=0 // pred_check_branch
    %28 = sbr.rel (0) target = $region29
  $region28: #{gru_model_forward.1} parent=0 // pred_region
    _
  $region29: #{gru_model_forward.1} parent=0 // pred_fallthru
    _
  // Predicated region
  $region30: #{gru_model_forward.1} parent=0 // pred_check
    _
  $region31: #{gru_model_forward.1} parent=0 // pred_check_branch
    %30 = sbr.rel (0) target = $region33
  $region32: #{gru_model_forward.1} parent=0 // pred_region
    _
  $region33: #{gru_model_forward.1} parent=0 // pred_fallthru
    _
  %v32 = vld [vmem:[%s0] sm:$0xf]
  %v33 = vld [vmem:[%s0 + $0x4] sm:$0xf]
  %v34 = vld [vmem:[%s0 + $0x8] sm:$0xf]
  %v35 = vld [vmem:[%s0 + $0xc] sm:$0xf]
  %v36 = vld [vmem:[%s0 + $0x10] sm:$0xf]
  %v37 = vld [vmem:[%s0 + $0x14] sm:$0xf]
  %v38 = vld [vmem:[%s0 + $0x18] sm:$0xf]
  %v39 = vld [vmem:[%s0 + $0x1c] sm:$0xf]
  %v40 = vld [vmem:[%s2] sm:$0xff]
  %v41 = vld [vmem:[%s2 + $0x8] sm:$0xf]
  %v42 = vld [vmem:[%s2 + $0xc] sm:$0xff]
  %v43 = vld [vmem:[%s2 + $0x14] sm:$0xf]
  %v44 = vld [vmem:[%s2 + $0x18] sm:$0xff]
  %v45 = vld [vmem:[%s2 + $0x20] sm:$0xf]
  %v46 = vld [vmem:[%s2 + $0x24] sm:$0xff]
  %v47 = vld [vmem:[%s2 + $0x2c] sm:$0xf]
  %v48 = vld [vmem:[%s2 + $0x30] sm:$0xff]
  %v49 = vld [vmem:[%s2 + $0x38] sm:$0xf]
  %v50 = vld [vmem:[%s2 + $0x3c] sm:$0xff]
  %v51 = vld [vmem:[%s2 + $0x44] sm:$0xf]
  %v52 = vld [vmem:[%s2 + $0x48] sm:$0xff]
  %v53 = vld [vmem:[%s2 + $0x50] sm:$0xf]
  %v54 = vld [vmem:[%s2 + $0x54] sm:$0xff]
  %v55 = vld [vmem:[%s2 + $0x5c] sm:$0xf]
  %v56 = vld [vmem:[%s2 + $0x60] sm:$0xff]
  %v57 = vld [vmem:[%s2 + $0x68] sm:$0xf]
  %v58 = vld [vmem:[%s2 + $0x6c] sm:$0xff]
  %v59 = vld [vmem:[%s2 + $0x74] sm:$0xf]
  %v60 = vld [vmem:[%s2 + $0x78] sm:$0xff]
  %v61 = vld [vmem:[%s2 + $0x80] sm:$0xf]
  %v62 = vld [vmem:[%s2 + $0x84] sm:$0xff]
  %v63 = vld [vmem:[%s2 + $0x8c] sm:$0xf]
  %v64 = vld [vmem:[%s2 + $0x90] sm:$0xff]
  %v65 = vld [vmem:[%s2 + $0x98] sm:$0xf]
  %v66 = vld [vmem:[%s2 + $0x9c] sm:$0xff]
  %v67 = vld [vmem:[%s2 + $0xa4] sm:$0xf]
  %v68 = vld [vmem:[%s2 + $0xa8] sm:$0xff]
  %v69 = vld [vmem:[%s2 + $0xb0] sm:$0xf]
  %v70 = vld [vmem:[%s2 + $0xb4] sm:$0xff]
  %v71 = vld [vmem:[%s2 + $0xbc] sm:$0xf]
  %v72 = vld [vmem:[%s3] sm:$0x7]
  %v74 = vlaneseq
  %v75 = vshrl.u32 %v74, 7
  %v76 = vsub.s32 0, %v75
  %v77 = vrot.slane %v72, %v76
  %v78 = vlaneseq
  %v79 = vshrl.u32 %v78, 7
  %v80 = vsub.s32 1, %v79
  %v81 = vrot.slane %v72, %v80
  %v82 = vlaneseq
  %v83 = vshrl.u32 %v82, 7
  %v84 = vsub.s32 2, %v83
  %v85 = vrot.slane %v72, %v84
  %v97 = vunpack.c.l.b16 %v32
  %v98 = vunpack.c.l.b16 %v33
  %v99 = vunpack.c.l.b16 %v34
  %v100 = vunpack.c.l.b16 %v35
  %v101 = vunpack.c.l.b16 %v36
  %v102 = vunpack.c.l.b16 %v37
  %v103 = vunpack.c.l.b16 %v38
  %v104 = vunpack.c.l.b16 %v39
  %v105 = vpack.c.b16 %v98, %v97
  %v106 = vpack.c.b16 %v100, %v99
  %v107 = vpack.c.b16 %v102, %v101
  %v108 = vpack.c.b16 %v104, %v103
  %v145 = vunpack.c.l.b16 %v40
  %v146 = vunpack.c.h.b16 %v40
  %v147 = vunpack.c.l.b16 %v41
  %v148 = vunpack.c.l.b16 %v42
  %v149 = vunpack.c.h.b16 %v42
  %v150 = vunpack.c.l.b16 %v43
  %v151 = vunpack.c.l.b16 %v44
  %v152 = vunpack.c.h.b16 %v44
  %v153 = vunpack.c.l.b16 %v45
  %v154 = vunpack.c.l.b16 %v46
  %v155 = vunpack.c.h.b16 %v46
  %v156 = vunpack.c.l.b16 %v47
  %v157 = vunpack.c.l.b16 %v48
  %v158 = vunpack.c.h.b16 %v48
  %v159 = vunpack.c.l.b16 %v49
  %v160 = vunpack.c.l.b16 %v50
  %v161 = vunpack.c.h.b16 %v50
  %v162 = vunpack.c.l.b16 %v51
  %v163 = vunpack.c.l.b16 %v52
  %v164 = vunpack.c.h.b16 %v52
  %v165 = vunpack.c.l.b16 %v53
  %v166 = vunpack.c.l.b16 %v54
  %v167 = vunpack.c.h.b16 %v54
  %v168 = vunpack.c.l.b16 %v55
  %v169 = vunpack.c.l.b16 %v56
  %v170 = vunpack.c.h.b16 %v56
  %v171 = vunpack.c.l.b16 %v57
  %v172 = vunpack.c.l.b16 %v58
  %v173 = vunpack.c.h.b16 %v58
  %v174 = vunpack.c.l.b16 %v59
  %v175 = vunpack.c.l.b16 %v60
  %v176 = vunpack.c.h.b16 %v60
  %v177 = vunpack.c.l.b16 %v61
  %v178 = vunpack.c.l.b16 %v62
  %v179 = vunpack.c.h.b16 %v62
  %v180 = vunpack.c.l.b16 %v63
  %v181 = vunpack.c.l.b16 %v64
  %v182 = vunpack.c.h.b16 %v64
  %v183 = vunpack.c.l.b16 %v65
  %v184 = vunpack.c.l.b16 %v66
  %v185 = vunpack.c.h.b16 %v66
  %v186 = vunpack.c.l.b16 %v67
  %v187 = vunpack.c.l.b16 %v68
  %v188 = vunpack.c.h.b16 %v68
  %v189 = vunpack.c.l.b16 %v69
  %v190 = vunpack.c.l.b16 %v70
  %v191 = vunpack.c.h.b16 %v70
  %v192 = vunpack.c.l.b16 %v71
  %v193 = vpack.c.b16 %v148, %v145
  %v194 = vpack.c.b16 %v149, %v146
  %v195 = vpack.c.b16 %v150, %v147
  %v196 = vpack.c.b16 %v154, %v151
  %v197 = vpack.c.b16 %v155, %v152
  %v198 = vpack.c.b16 %v156, %v153
  %v199 = vpack.c.b16 %v160, %v157
  %v200 = vpack.c.b16 %v161, %v158
  %v201 = vpack.c.b16 %v162, %v159
  %v202 = vpack.c.b16 %v166, %v163
  %v203 = vpack.c.b16 %v167, %v164
  %v204 = vpack.c.b16 %v168, %v165
  %v205 = vpack.c.b16 %v172, %v169
  %v206 = vpack.c.b16 %v173, %v170
  %v207 = vpack.c.b16 %v174, %v171
  %v208 = vpack.c.b16 %v178, %v175
  %v209 = vpack.c.b16 %v179, %v176
  %v210 = vpack.c.b16 %v180, %v177
  %v211 = vpack.c.b16 %v184, %v181
  %v212 = vpack.c.b16 %v185, %v182
  %v213 = vpack.c.b16 %v186, %v183
  %v214 = vpack.c.b16 %v190, %v187
  %v215 = vpack.c.b16 %v191, %v188
  %v216 = vpack.c.b16 %v192, %v189
  %241 = vmatprep.subr.bf16.mxu0 %v194
  %242 = vmatpush1.bf16.msra.mxu0 %v193
  %243 = vmatprep.subr.bf16.mxu0 %v197
  %244 = vmatpush1.bf16.msra.mxu0 %v196
  %245 = vmatprep.subr.bf16.mxu0 %v200
  %246 = vmatpush1.bf16.msra.mxu0 %v199
  %247 = vmatprep.subr.bf16.mxu0 %v203
  %248 = vmatpush1.bf16.msra.mxu0 %v202
  %249 = vmatprep.subr.bf16.mxu0 %v206
  %250 = vmatpush1.bf16.msra.mxu0 %v205
  %251 = vmatprep.subr.bf16.mxu0 %v209
  %252 = vmatpush1.bf16.msra.mxu0 %v208
  %253 = vmatprep.subr.bf16.mxu0 %v212
  %254 = vmatpush1.bf16.msra.mxu0 %v211
  %255 = vmatprep.subr.bf16.mxu0 %v215
  %256 = vmatpush1.bf16.msra.mxu0 %v214
  %257 = vmatprep.subr.bf16.mxu0 0
  %258 = vmatpush1.bf16.msra.mxu0 0
  %259 = vmatprep.subr.bf16.mxu0 0
  %260 = vmatpush1.bf16.msra.mxu0 0
  %261 = vmatprep.subr.bf16.mxu0 0
  %262 = vmatpush1.bf16.msra.mxu0 0
  %263 = vmatprep.subr.bf16.mxu0 0
  %264 = vmatpush1.bf16.msra.mxu0 0
  %265 = vmatprep.subr.bf16.mxu0 0
  %266 = vmatpush1.bf16.msra.mxu0 0
  %267 = vmatprep.subr.bf16.mxu0 0
  %268 = vmatpush1.bf16.msra.mxu0 0
  %269 = vmatprep.subr.bf16.mxu0 0
  %270 = vmatpush1.bf16.msra.mxu0 0
  %271 = vmatprep.subr.bf16.mxu0 0
  %272 = vmatpush1.bf16.msra.mxu0 0
  %273 = vmatprep.mubr.bf16.mxu0 0
  %274 = vmatmul.mubr.bf16.gmra.mrb[0].mxu0 %v105
  %v275 = vpop.f32.mrb[0].mxu0
  %v276 = vadd.f32 %v77, %v275
  %v277 = vpop.f32.mrb[0].mxu0
  %v278 = vadd.f32 %v81, %v277
  %v279 = vpop.f32.mrb[0].mxu0
  %v280 = vadd.f32 %v77, %v279
  %v281 = vpop.f32.mrb[0].mxu0
  %v282 = vadd.f32 %v81, %v281
  %283 = vmatprep.mubr.bf16.mxu0 0
  %284 = vmatmul.mubr.bf16.gmra.mrb[0].mxu0 %v106
  %v285 = vpop.f32.mrb[0].mxu0
  %v286 = vadd.f32 %v77, %v285
  %v287 = vpop.f32.mrb[0].mxu0
  %v288 = vadd.f32 %v81, %v287
  %v289 = vpop.f32.mrb[0].mxu0
  %v290 = vadd.f32 %v77, %v289
  %v291 = vpop.f32.mrb[0].mxu0
  %v292 = vadd.f32 %v81, %v291
  %293 = vmatprep.mubr.bf16.mxu0 0
  %294 = vmatmul.mubr.bf16.gmra.mrb[0].mxu0 %v107
  %v295 = vpop.f32.mrb[0].mxu0
  %v296 = vadd.f32 %v77, %v295
  %v297 = vpop.f32.mrb[0].mxu0
  %v298 = vadd.f32 %v81, %v297
  %v299 = vpop.f32.mrb[0].mxu0
  %v300 = vadd.f32 %v77, %v299
  %v301 = vpop.f32.mrb[0].mxu0
  %v302 = vadd.f32 %v81, %v301
  %303 = vmatprep.mubr.bf16.mxu0 0
  %304 = vmatmul.mubr.bf16.gmra.mrb[0].mxu0 %v108
  %v305 = vpop.f32.mrb[0].mxu0
  %v306 = vadd.f32 %v77, %v305
  %v307 = vpop.f32.mrb[0].mxu0
  %v308 = vadd.f32 %v81, %v307
  %v309 = vpop.f32.mrb[0].mxu0
  %v310 = vadd.f32 %v77, %v309
  %v311 = vpop.f32.mrb[0].mxu0
  %v312 = vadd.f32 %v81, %v311
  %313 = vdwg.mxu0
  %314 = vmatprep.subr.bf16.mxu0 0
  %315 = vmatpush1.bf16.msra.mxu0 %v195
  %316 = vmatprep.subr.bf16.mxu0 0
  %317 = vmatpush1.bf16.msra.mxu0 %v198
  %318 = vmatprep.subr.bf16.mxu0 0
  %319 = vmatpush1.bf16.msra.mxu0 %v201
  %320 = vmatprep.subr.bf16.mxu0 0
  %321 = vmatpush1.bf16.msra.mxu0 %v204
  %322 = vmatprep.subr.bf16.mxu0 0
  %323 = vmatpush1.bf16.msra.mxu0 %v207
  %324 = vmatprep.subr.bf16.mxu0 0
  %325 = vmatpush1.bf16.msra.mxu0 %v210
  %326 = vmatprep.subr.bf16.mxu0 0
  %327 = vmatpush1.bf16.msra.mxu0 %v213
  %328 = vmatprep.subr.bf16.mxu0 0
  %329 = vmatpush1.bf16.msra.mxu0 %v216
  %330 = vmatprep.subr.bf16.mxu0 0
  %331 = vmatpush1.bf16.msra.mxu0 0
  %332 = vmatprep.subr.bf16.mxu0 0
  %333 = vmatpush1.bf16.msra.mxu0 0
  %334 = vmatprep.subr.bf16.mxu0 0
  %335 = vmatpush1.bf16.msra.mxu0 0
  %336 = vmatprep.subr.bf16.mxu0 0
  %337 = vmatpush1.bf16.msra.mxu0 0
  %338 = vmatprep.subr.bf16.mxu0 0
  %339 = vmatpush1.bf16.msra.mxu0 0
  %340 = vmatprep.subr.bf16.mxu0 0
  %341 = vmatpush1.bf16.msra.mxu0 0
  %342 = vmatprep.subr.bf16.mxu0 0
  %343 = vmatpush1.bf16.msra.mxu0 0
  %344 = vmatprep.subr.bf16.mxu0 0
  %345 = vmatpush1.bf16.msra.mxu0 0
  %346 = vmatprep.mubr.bf16.mxu0 0
  %347 = vmatmul.mubr.bf16.gmra.mrb[0].mxu0 %v105
  %v348 = vpop.f32.mrb[0].mxu0
  %v349 = vadd.f32 %v85, %v348
  %v350 = vpop.f32.mrb[0].mxu0
  %v351 = vpop.f32.mrb[0].mxu0
  %v352 = vadd.f32 %v85, %v351
  %v353 = vpop.f32.mrb[0].mxu0
  %354 = vmatprep.mubr.bf16.mxu0 0
  %355 = vmatmul.mubr.bf16.gmra.mrb[0].mxu0 %v106
  %v356 = vpop.f32.mrb[0].mxu0
  %v357 = vadd.f32 %v85, %v356
  %v358 = vpop.f32.mrb[0].mxu0
  %v359 = vpop.f32.mrb[0].mxu0
  %v360 = vadd.f32 %v85, %v359
  %v361 = vpop.f32.mrb[0].mxu0
  %362 = vmatprep.mubr.bf16.mxu0 0
  %363 = vmatmul.mubr.bf16.gmra.mrb[0].mxu0 %v107
  %v364 = vpop.f32.mrb[0].mxu0
  %v365 = vadd.f32 %v85, %v364
  %v366 = vpop.f32.mrb[0].mxu0
  %v367 = vpop.f32.mrb[0].mxu0
  %v368 = vadd.f32 %v85, %v367
  %v369 = vpop.f32.mrb[0].mxu0
  %370 = vmatprep.mubr.bf16.mxu0 0
  %371 = vmatmul.mubr.bf16.gmra.mrb[0].mxu0 %v108
  %v372 = vpop.f32.mrb[0].mxu0
  %v373 = vadd.f32 %v85, %v372
  %v374 = vpop.f32.mrb[0].mxu0
  %v375 = vpop.f32.mrb[0].mxu0
  %v376 = vadd.f32 %v85, %v375
  %v377 = vpop.f32.mrb[0].mxu0
  %378 = vdwg.mxu0
  %379 = vst [vmem:[#allocation2] sm:$0xff] %v276
  %380 = vst [vmem:[#allocation2 + $0x8] sm:$0xff] %v278
  %381 = vst [vmem:[#allocation2 + $0x10] sm:$0xff] %v349
  %382 = vst [vmem:[#allocation2 + $0x18] sm:$0xff] %v280
  %383 = vst [vmem:[#allocation2 + $0x20] sm:$0xff] %v282
  %384 = vst [vmem:[#allocation2 + $0x28] sm:$0xff] %v352
  %385 = vst [vmem:[#allocation2 + $0x30] sm:$0xff] %v286
  %386 = vst [vmem:[#allocation2 + $0x38] sm:$0xff] %v288
  %387 = vst [vmem:[#allocation2 + $0x40] sm:$0xff] %v357
  %388 = vst [vmem:[#allocation2 + $0x48] sm:$0xff] %v290
  %389 = vst [vmem:[#allocation2 + $0x50] sm:$0xff] %v292
  %390 = vst [vmem:[#allocation2 + $0x58] sm:$0xff] %v360
  %391 = vst [vmem:[#allocation2 + $0x60] sm:$0xff] %v296
  %392 = vst [vmem:[#allocation2 + $0x68] sm:$0xff] %v298
  %393 = vst [vmem:[#allocation2 + $0x70] sm:$0xff] %v365
  %394 = vst [vmem:[#allocation2 + $0x78] sm:$0xff] %v300
  %395 = vst [vmem:[#allocation2 + $0x80] sm:$0xff] %v302
  %396 = vst [vmem:[#allocation2 + $0x88] sm:$0xff] %v368
  %397 = vst [vmem:[#allocation2 + $0x90] sm:$0xff] %v306
  %398 = vst [vmem:[#allocation2 + $0x98] sm:$0xff] %v308
  %399 = vst [vmem:[#allocation2 + $0xa0] sm:$0xff] %v373
  %400 = vst [vmem:[#allocation2 + $0xa8] sm:$0xff] %v310
  %401 = vst [vmem:[#allocation2 + $0xb0] sm:$0xff] %v312
  %402 = vst [vmem:[#allocation2 + $0xb8] sm:$0xff] %v376
  %v403 = vlaneseq
  %v404 = vand.u32 %v403, 127
  %vm405 = vcmp.ge.s32.totalorder %v404, 64
  %v406 = vsel %vm405, 1, 0
  %v407 = vld [vmem:[%s1] sm:$0xff]
  %408 = vset.pattern.permute.xlu0 0
  %409 = vperm.xlu0 %408, %v407
  %v410 = vpop.permute.xlu0 %409
  %v411 = vadd.s32 %v410, %v406
  %v412 = vld [vmem:[%s5] sm:$0x1]
  %v414 = vlaneseq
  %v415 = vshrl.u32 %v414, 7
  %v416 = vsub.s32 0, %v415
  %v417 = vrot.slane %v412, %v416
  %s419 = smul.u32 0, 3
  %s420 = smul.addr %s419, 8
  %s421 = scalar_lea.vmem [#allocation2], %s420
  %v422 = vld [vmem:[%s421] sm:$0xff]
  %v423 = vld [vmem:[%s421 + $0x8] sm:$0xff]
  %v424 = vld [vmem:[%s421 + $0x10] sm:$0xff]
  %v425 = vld [vmem:[%s4] sm:$0xff]
  %v426 = vld [vmem:[%s4 + $0x8] sm:$0xff]
  %v427 = vld [vmem:[%s4 + $0x10] sm:$0xff]
  %v428 = vld [vmem:[%s4 + $0x18] sm:$0xff]
  %v429 = vld [vmem:[%s4 + $0x20] sm:$0xff]
  %v430 = vld [vmem:[%s4 + $0x28] sm:$0xff]
  %v431 = vld [vmem:[%s4 + $0x30] sm:$0xff]
  %v432 = vld [vmem:[%s4 + $0x38] sm:$0xff]
  %v433 = vld [vmem:[%s4 + $0x40] sm:$0xff]
  %v434 = vld [vmem:[%s4 + $0x48] sm:$0xff]
  %v435 = vld [vmem:[%s4 + $0x50] sm:$0xff]
  %v436 = vld [vmem:[%s4 + $0x58] sm:$0xff]
  %v437 = vld [vmem:[%s4 + $0x60] sm:$0xff]
  %v438 = vld [vmem:[%s4 + $0x68] sm:$0xff]
  %v439 = vld [vmem:[%s4 + $0x70] sm:$0xff]
  %v440 = vld [vmem:[%s4 + $0x78] sm:$0xff]
  %v441 = vld [vmem:[%s4 + $0x80] sm:$0xff]
  %v442 = vld [vmem:[%s4 + $0x88] sm:$0xff]
  %v443 = vld [vmem:[%s4 + $0x90] sm:$0xff]
  %v444 = vld [vmem:[%s4 + $0x98] sm:$0xff]
  %v445 = vld [vmem:[%s4 + $0xa0] sm:$0xff]
  %v446 = vld [vmem:[%s4 + $0xa8] sm:$0xff]
  %v447 = vld [vmem:[%s4 + $0xb0] sm:$0xff]
  %v448 = vld [vmem:[%s4 + $0xb8] sm:$0xff]
  %v449 = vld [vmem:[%s4 + $0xc0] sm:$0xff]
  %v450 = vld [vmem:[%s4 + $0xc8] sm:$0xff]
  %v451 = vld [vmem:[%s4 + $0xd0] sm:$0xff]
  %v452 = vld [vmem:[%s4 + $0xd8] sm:$0xff]
  %v453 = vld [vmem:[%s4 + $0xe0] sm:$0xff]
  %v454 = vld [vmem:[%s4 + $0xe8] sm:$0xff]
  %v455 = vld [vmem:[%s4 + $0xf0] sm:$0xff]
  %v456 = vld [vmem:[%s4 + $0xf8] sm:$0xff]
  %v489 = vunpack.c.l.b16 %v425
  %v490 = vunpack.c.h.b16 %v425
  %v491 = vunpack.c.l.b16 %v426
  %v492 = vunpack.c.h.b16 %v426
  %v493 = vunpack.c.l.b16 %v427
  %v494 = vunpack.c.h.b16 %v427
  %v495 = vunpack.c.l.b16 %v428
  %v496 = vunpack.c.h.b16 %v428
  %v497 = vunpack.c.l.b16 %v429
  %v498 = vunpack.c.h.b16 %v429
  %v499 = vunpack.c.l.b16 %v430
  %v500 = vunpack.c.h.b16 %v430
  %v501 = vunpack.c.l.b16 %v431
  %v502 = vunpack.c.h.b16 %v431
  %v503 = vunpack.c.l.b16 %v432
  %v504 = vunpack.c.h.b16 %v432
  %v505 = vunpack.c.l.b16 %v433
  %v506 = vunpack.c.h.b16 %v433
  %v507 = vunpack.c.l.b16 %v434
  %v508 = vunpack.c.h.b16 %v434
  %v509 = vunpack.c.l.b16 %v435
  %v510 = vunpack.c.h.b16 %v435
  %v511 = vunpack.c.l.b16 %v436
  %v512 = vunpack.c.h.b16 %v436
  %v513 = vunpack.c.l.b16 %v437
  %v514 = vunpack.c.h.b16 %v437
  %v515 = vunpack.c.l.b16 %v438
  %v516 = vunpack.c.h.b16 %v438
  %v517 = vunpack.c.l.b16 %v439
  %v518 = vunpack.c.h.b16 %v439
  %v519 = vunpack.c.l.b16 %v440
  %v520 = vunpack.c.h.b16 %v440
  %v521 = vunpack.c.l.b16 %v441
  %v522 = vunpack.c.h.b16 %v441
  %v523 = vunpack.c.l.b16 %v442
  %v524 = vunpack.c.h.b16 %v442
  %v525 = vunpack.c.l.b16 %v443
  %v526 = vunpack.c.h.b16 %v443
  %v527 = vunpack.c.l.b16 %v444
  %v528 = vunpack.c.h.b16 %v444
  %v529 = vunpack.c.l.b16 %v445
  %v530 = vunpack.c.h.b16 %v445
  %v531 = vunpack.c.l.b16 %v446
  %v532 = vunpack.c.h.b16 %v446
  %v533 = vunpack.c.l.b16 %v447
  %v534 = vunpack.c.h.b16 %v447
  %v535 = vunpack.c.l.b16 %v448
  %v536 = vunpack.c.h.b16 %v448
  %v537 = vunpack.c.l.b16 %v449
  %v538 = vunpack.c.h.b16 %v449
  %v539 = vunpack.c.l.b16 %v450
  %v540 = vunpack.c.h.b16 %v450
  %v541 = vunpack.c.l.b16 %v451
  %v542 = vunpack.c.h.b16 %v451
  %v543 = vunpack.c.l.b16 %v452
  %v544 = vunpack.c.h.b16 %v452
  %v545 = vunpack.c.l.b16 %v453
  %v546 = vunpack.c.h.b16 %v453
  %v547 = vunpack.c.l.b16 %v454
  %v548 = vunpack.c.h.b16 %v454
  %v549 = vunpack.c.l.b16 %v455
  %v550 = vunpack.c.h.b16 %v455
  %v551 = vunpack.c.l.b16 %v456
  %v552 = vunpack.c.h.b16 %v456
  %v553 = vpack.c.b16 %v493, %v489
  %v554 = vpack.c.b16 %v494, %v490
  %v555 = vpack.c.b16 %v495, %v491
  %v556 = vpack.c.b16 %v496, %v492
  %v557 = vpack.c.b16 %v501, %v497
  %v558 = vpack.c.b16 %v502, %v498
  %v559 = vpack.c.b16 %v503, %v499
  %v560 = vpack.c.b16 %v504, %v500
  %v561 = vpack.c.b16 %v509, %v505
  %v562 = vpack.c.b16 %v510, %v506
  %v563 = vpack.c.b16 %v511, %v507
  %v564 = vpack.c.b16 %v512, %v508
  %v565 = vpack.c.b16 %v517, %v513
  %v566 = vpack.c.b16 %v518, %v514
  %v567 = vpack.c.b16 %v519, %v515
  %v568 = vpack.c.b16 %v520, %v516
  %v569 = vpack.c.b16 %v525, %v521
  %v570 = vpack.c.b16 %v526, %v522
  %v571 = vpack.c.b16 %v527, %v523
  %v572 = vpack.c.b16 %v528, %v524
  %v573 = vpack.c.b16 %v533, %v529
  %v574 = vpack.c.b16 %v534, %v530
  %v575 = vpack.c.b16 %v535, %v531
  %v576 = vpack.c.b16 %v536, %v532
  %v577 = vpack.c.b16 %v541, %v537
  %v578 = vpack.c.b16 %v542, %v538
  %v579 = vpack.c.b16 %v543, %v539
  %v580 = vpack.c.b16 %v544, %v540
  %v581 = vpack.c.b16 %v549, %v545
  %v582 = vpack.c.b16 %v550, %v546
  %v583 = vpack.c.b16 %v551, %v547
  %v584 = vpack.c.b16 %v552, %v548
  %617 = vmatprep.subr.bf16.mxu0 %v554
  %618 = vmatpush1.bf16.msra.mxu0 %v553
  %619 = vmatprep.subr.bf16.mxu0 %v558
  %620 = vmatpush1.bf16.msra.mxu0 %v557
  %621 = vmatprep.subr.bf16.mxu0 %v562
  %622 = vmatpush1.bf16.msra.mxu0 %v561
  %623 = vmatprep.subr.bf16.mxu0 %v566
  %624 = vmatpush1.bf16.msra.mxu0 %v565
  %625 = vmatprep.subr.bf16.mxu0 %v570
  %626 = vmatpush1.bf16.msra.mxu0 %v569
  %627 = vmatprep.subr.bf16.mxu0 %v574
  %628 = vmatpush1.bf16.msra.mxu0 %v573
  %629 = vmatprep.subr.bf16.mxu0 %v578
  %630 = vmatpush1.bf16.msra.mxu0 %v577
  %631 = vmatprep.subr.bf16.mxu0 %v582
  %632 = vmatpush1.bf16.msra.mxu0 %v581
  %633 = vmatprep.subr.bf16.mxu0 0
  %634 = vmatpush1.bf16.msra.mxu0 0
  %635 = vmatprep.subr.bf16.mxu0 0
  %636 = vmatpush1.bf16.msra.mxu0 0
  %637 = vmatprep.subr.bf16.mxu0 0
  %638 = vmatpush1.bf16.msra.mxu0 0
  %639 = vmatprep.subr.bf16.mxu0 0
  %640 = vmatpush1.bf16.msra.mxu0 0
  %641 = vmatprep.subr.bf16.mxu0 0
  %642 = vmatpush1.bf16.msra.mxu0 0
  %643 = vmatprep.subr.bf16.mxu0 0
  %644 = vmatpush1.bf16.msra.mxu0 0
  %645 = vmatprep.subr.bf16.mxu0 0
  %646 = vmatpush1.bf16.msra.mxu0 0
  %647 = vmatprep.subr.bf16.mxu0 0
  %648 = vmatpush1.bf16.msra.mxu0 0
  %649 = vmatprep.mubr.bf16.mxu0 0
  %650 = vmatmul.mubr.bf16.gmra.mrb[0].mxu0 0
  %v651 = vpop.f32.mrb[0].mxu0
  %v652 = vadd.f32 0.0, %v651
  %v653 = vpop.f32.mrb[0].mxu0
  %v654 = vadd.f32 0.0, %v653
  %v655 = vpop.f32.mrb[0].mxu0
  %v656 = vpop.f32.mrb[0].mxu0
  %657 = vdwg.mxu0
  %658 = vmatprep.subr.bf16.mxu0 %v556
  %659 = vmatpush1.bf16.msra.mxu0 %v555
  %660 = vmatprep.subr.bf16.mxu0 %v560
  %661 = vmatpush1.bf16.msra.mxu0 %v559
  %662 = vmatprep.subr.bf16.mxu0 %v564
  %663 = vmatpush1.bf16.msra.mxu0 %v563
  %664 = vmatprep.subr.bf16.mxu0 %v568
  %665 = vmatpush1.bf16.msra.mxu0 %v567
  %666 = vmatprep.subr.bf16.mxu0 %v572
  %667 = vmatpush1.bf16.msra.mxu0 %v571
  %668 = vmatprep.subr.bf16.mxu0 %v576
  %669 = vmatpush1.bf16.msra.mxu0 %v575
  %670 = vmatprep.subr.bf16.mxu0 %v580
  %671 = vmatpush1.bf16.msra.mxu0 %v579
  %672 = vmatprep.subr.bf16.mxu0 %v584
  %673 = vmatpush1.bf16.msra.mxu0 %v583
  %674 = vmatprep.subr.bf16.mxu0 0
  %675 = vmatpush1.bf16.msra.mxu0 0
  %676 = vmatprep.subr.bf16.mxu0 0
  %677 = vmatpush1.bf16.msra.mxu0 0
  %678 = vmatprep.subr.bf16.mxu0 0
  %679 = vmatpush1.bf16.msra.mxu0 0
  %680 = vmatprep.subr.bf16.mxu0 0
  %681 = vmatpush1.bf16.msra.mxu0 0
  %682 = vmatprep.subr.bf16.mxu0 0
  %683 = vmatpush1.bf16.msra.mxu0 0
  %684 = vmatprep.subr.bf16.mxu0 0
  %685 = vmatpush1.bf16.msra.mxu0 0
  %686 = vmatprep.subr.bf16.mxu0 0
  %687 = vmatpush1.bf16.msra.mxu0 0
  %688 = vmatprep.subr.bf16.mxu0 0
  %689 = vmatpush1.bf16.msra.mxu0 0
  %690 = vmatprep.mubr.bf16.mxu0 0
  %691 = vmatmul.mubr.bf16.gmra.mrb[0].mxu0 0
  %v692 = vpop.f32.mrb[0].mxu0
  %v693 = vadd.f32 0.0, %v692
  %v694 = vpop.f32.mrb[0].mxu0
  %v695 = vadd.f32 0.0, %v694
  %v696 = vpop.f32.mrb[0].mxu0
  %v697 = vpop.f32.mrb[0].mxu0
  %698 = vdwg.mxu0
  %v699 = vadd.f32 %v422, %v652
  %v700 = vadd.f32 %v423, %v654
  %v701 = vxor.u32 %v699, 2147483648
  %v702 = vxor.u32 %v700, 2147483648
  %v703 = vmul.f32 %v701, 1.442695
  %v704 = vpow.pop %v703
  %v705 = vmul.f32 %v702, 1.442695
  %v706 = vpow.pop %v705
  %v707 = vadd.f32 %v704, 1.0
  %v708 = vadd.f32 %v706, 1.0
  %v709 = vrcp.pop %v707
  %v710 = vmul.f32 1.0, %v709
  %v711 = vrcp.pop %v708
  %v712 = vmul.f32 1.0, %v711
  %v713 = vadd.f32 %v424, %v695
  %v714 = vadd.f32 %v693, %v417
  %v715 = vmul.f32 %v710, %v714
  %v716 = vadd.f32 %v713, %v715
  %v717 = vtanh.pop %v716
  %v718 = vsub.f32 0.0, %v717
  %v719 = vmul.f32 %v712, %v718
  %v720 = vadd.f32 %v717, %v719
  %vm721 = vcmp.le.s32.totalorder %v406, 0
  %vm722 = vcmp.gt.s32.totalorder %v411, 0
  %vm723 = vmand %vm721, %vm722
  %v724 = vsel %vm723, %v720, 0.0
  %s725 = smul.u32 1, 3
  %s726 = smul.addr %s725, 8
  %s727 = scalar_lea.vmem [#allocation2], %s726
  %v728 = vld [vmem:[%s727] sm:$0xff]
  %v729 = vld [vmem:[%s727 + $0x8] sm:$0xff]
  %v730 = vld [vmem:[%s727 + $0x10] sm:$0xff]
  %v731 = vpack.c.bf16 %v724, %v724
  %732 = vmatprep.subr.bf16.mxu0 %v554
  %733 = vmatpush1.bf16.msra.mxu0 %v553
  %734 = vmatprep.subr.bf16.mxu0 %v558
  %735 = vmatpush1.bf16.msra.mxu0 %v557
  %736 = vmatprep.subr.bf16.mxu0 %v562
  %737 = vmatpush1.bf16.msra.mxu0 %v561
  %738 = vmatprep.subr.bf16.mxu0 %v566
  %739 = vmatpush1.bf16.msra.mxu0 %v565
  %740 = vmatprep.subr.bf16.mxu0 %v570
  %741 = vmatpush1.bf16.msra.mxu0 %v569
  %742 = vmatprep.subr.bf16.mxu0 %v574
  %743 = vmatpush1.bf16.msra.mxu0 %v573
  %744 = vmatprep.subr.bf16.mxu0 %v578
  %745 = vmatpush1.bf16.msra.mxu0 %v577
  %746 = vmatprep.subr.bf16.mxu0 %v582
  %747 = vmatpush1.bf16.msra.mxu0 %v581
  %748 = vmatprep.subr.bf16.mxu0 0
  %749 = vmatpush1.bf16.msra.mxu0 0
  %750 = vmatprep.subr.bf16.mxu0 0
  %751 = vmatpush1.bf16.msra.mxu0 0
  %752 = vmatprep.subr.bf16.mxu0 0
  %753 = vmatpush1.bf16.msra.mxu0 0
  %754 = vmatprep.subr.bf16.mxu0 0
  %755 = vmatpush1.bf16.msra.mxu0 0
  %756 = vmatprep.subr.bf16.mxu0 0
  %757 = vmatpush1.bf16.msra.mxu0 0
  %758 = vmatprep.subr.bf16.mxu0 0
  %759 = vmatpush1.bf16.msra.mxu0 0
  %760 = vmatprep.subr.bf16.mxu0 0
  %761 = vmatpush1.bf16.msra.mxu0 0
  %762 = vmatprep.subr.bf16.mxu0 0
  %763 = vmatpush1.bf16.msra.mxu0 0
  %764 = vmatprep.mubr.bf16.mxu0 0
  %765 = vmatmul.mubr.bf16.gmra.mrb[0].mxu0 %v731
  %v766 = vpop.f32.mrb[0].mxu0
  %v767 = vadd.f32 0.0, %v766
  %v768 = vpop.f32.mrb[0].mxu0
  %v769 = vadd.f32 0.0, %v768
  %v770 = vpop.f32.mrb[0].mxu0
  %v771 = vpop.f32.mrb[0].mxu0
  %772 = vdwg.mxu0
  %773 = vmatprep.subr.bf16.mxu0 %v556
  %774 = vmatpush1.bf16.msra.mxu0 %v555
  %775 = vmatprep.subr.bf16.mxu0 %v560
  %776 = vmatpush1.bf16.msra.mxu0 %v559
  %777 = vmatprep.subr.bf16.mxu0 %v564
  %778 = vmatpush1.bf16.msra.mxu0 %v563
  %779 = vmatprep.subr.bf16.mxu0 %v568
  %780 = vmatpush1.bf16.msra.mxu0 %v567
  %781 = vmatprep.subr.bf16.mxu0 %v572
  %782 = vmatpush1.bf16.msra.mxu0 %v571
  %783 = vmatprep.subr.bf16.mxu0 %v576
  %784 = vmatpush1.bf16.msra.mxu0 %v575
  %785 = vmatprep.subr.bf16.mxu0 %v580
  %786 = vmatpush1.bf16.msra.mxu0 %v579
  %787 = vmatprep.subr.bf16.mxu0 %v584
  %788 = vmatpush1.bf16.msra.mxu0 %v583
  %789 = vmatprep.subr.bf16.mxu0 0
  %790 = vmatpush1.bf16.msra.mxu0 0
  %791 = vmatprep.subr.bf16.mxu0 0
  %792 = vmatpush1.bf16.msra.mxu0 0
  %793 = vmatprep.subr.bf16.mxu0 0
  %794 = vmatpush1.bf16.msra.mxu0 0
  %795 = vmatprep.subr.bf16.mxu0 0
  %796 = vmatpush1.bf16.msra.mxu0 0
  %797 = vmatprep.subr.bf16.mxu0 0
  %798 = vmatpush1.bf16.msra.mxu0 0
  %799 = vmatprep.subr.bf16.mxu0 0
  %800 = vmatpush1.bf16.msra.mxu0 0
  %801 = vmatprep.subr.bf16.mxu0 0
  %802 = vmatpush1.bf16.msra.mxu0 0
  %803 = vmatprep.subr.bf16.mxu0 0
  %804 = vmatpush1.bf16.msra.mxu0 0
  %805 = vmatprep.mubr.bf16.mxu0 0
  %806 = vmatmul.mubr.bf16.gmra.mrb[0].mxu0 %v731
  %v807 = vpop.f32.mrb[0].mxu0
  %v808 = vadd.f32 0.0, %v807
  %v809 = vpop.f32.mrb[0].mxu0
  %v810 = vadd.f32 0.0, %v809
  %v811 = vpop.f32.mrb[0].mxu0
  %v812 = vpop.f32.mrb[0].mxu0
  %813 = vdwg.mxu0
  %v814 = vadd.f32 %v728, %v767
  %v815 = vadd.f32 %v729, %v769
  %v816 = vxor.u32 %v814, 2147483648
  %v817 = vxor.u32 %v815, 2147483648
  %v818 = vmul.f32 %v816, 1.442695
  %v819 = vpow.pop %v818
  %v820 = vmul.f32 %v817, 1.442695
  %v821 = vpow.pop %v820
  %v822 = vadd.f32 %v819, 1.0
  %v823 = vadd.f32 %v821, 1.0
  %v824 = vrcp.pop %v822
  %v825 = vmul.f32 1.0, %v824
  %v826 = vrcp.pop %v823
  %v827 = vmul.f32 1.0, %v826
  %v828 = vadd.f32 %v730, %v810
  %v829 = vadd.f32 %v808, %v417
  %v830 = vmul.f32 %v825, %v829
  %v831 = vadd.f32 %v828, %v830
  %v832 = vtanh.pop %v831
  %v833 = vsub.f32 %v724, %v832
  %v834 = vmul.f32 %v827, %v833
  %v835 = vadd.f32 %v832, %v834
  %vm836 = vcmp.le.s32.totalorder %v406, 1
  %vm837 = vcmp.gt.s32.totalorder %v411, 1
  %vm838 = vmand %vm836, %vm837
  %v839 = vsel %vm838, %v835, %v724
  %s840 = smul.u32 2, 3
  %s841 = smul.addr %s840, 8
  %s842 = scalar_lea.vmem [#allocation2], %s841
  %v843 = vld [vmem:[%s842] sm:$0xff]
  %v844 = vld [vmem:[%s842 + $0x8] sm:$0xff]
  %v845 = vld [vmem:[%s842 + $0x10] sm:$0xff]
  %v846 = vpack.c.bf16 %v839, %v839
  %847 = vmatprep.subr.bf16.mxu0 %v554
  %848 = vmatpush1.bf16.msra.mxu0 %v553
  %849 = vmatprep.subr.bf16.mxu0 %v558
  %850 = vmatpush1.bf16.msra.mxu0 %v557
  %851 = vmatprep.subr.bf16.mxu0 %v562
  %852 = vmatpush1.bf16.msra.mxu0 %v561
  %853 = vmatprep.subr.bf16.mxu0 %v566
  %854 = vmatpush1.bf16.msra.mxu0 %v565
  %855 = vmatprep.subr.bf16.mxu0 %v570
  %856 = vmatpush1.bf16.msra.mxu0 %v569
  %857 = vmatprep.subr.bf16.mxu0 %v574
  %858 = vmatpush1.bf16.msra.mxu0 %v573
  %859 = vmatprep.subr.bf16.mxu0 %v578
  %860 = vmatpush1.bf16.msra.mxu0 %v577
  %861 = vmatprep.subr.bf16.mxu0 %v582
  %862 = vmatpush1.bf16.msra.mxu0 %v581
  %863 = vmatprep.subr.bf16.mxu0 0
  %864 = vmatpush1.bf16.msra.mxu0 0
  %865 = vmatprep.subr.bf16.mxu0 0
  %866 = vmatpush1.bf16.msra.mxu0 0
  %867 = vmatprep.subr.bf16.mxu0 0
  %868 = vmatpush1.bf16.msra.mxu0 0
  %869 = vmatprep.subr.bf16.mxu0 0
  %870 = vmatpush1.bf16.msra.mxu0 0
  %871 = vmatprep.subr.bf16.mxu0 0
  %872 = vmatpush1.bf16.msra.mxu0 0
  %873 = vmatprep.subr.bf16.mxu0 0
  %874 = vmatpush1.bf16.msra.mxu0 0
  %875 = vmatprep.subr.bf16.mxu0 0
  %876 = vmatpush1.bf16.msra.mxu0 0
  %877 = vmatprep.subr.bf16.mxu0 0
  %878 = vmatpush1.bf16.msra.mxu0 0
  %879 = vmatprep.mubr.bf16.mxu0 0
  %880 = vmatmul.mubr.bf16.gmra.mrb[0].mxu0 %v846
  %v881 = vpop.f32.mrb[0].mxu0
  %v882 = vadd.f32 0.0, %v881
  %v883 = vpop.f32.mrb[0].mxu0
  %v884 = vadd.f32 0.0, %v883
  %v885 = vpop.f32.mrb[0].mxu0
  %v886 = vpop.f32.mrb[0].mxu0
  %887 = vdwg.mxu0
  %888 = vmatprep.subr.bf16.mxu0 %v556
  %889 = vmatpush1.bf16.msra.mxu0 %v555
  %890 = vmatprep.subr.bf16.mxu0 %v560
  %891 = vmatpush1.bf16.msra.mxu0 %v559
  %892 = vmatprep.subr.bf16.mxu0 %v564
  %893 = vmatpush1.bf16.msra.mxu0 %v563
  %894 = vmatprep.subr.bf16.mxu0 %v568
  %895 = vmatpush1.bf16.msra.mxu0 %v567
  %896 = vmatprep.subr.bf16.mxu0 %v572
  %897 = vmatpush1.bf16.msra.mxu0 %v571
  %898 = vmatprep.subr.bf16.mxu0 %v576
  %899 = vmatpush1.bf16.msra.mxu0 %v575
  %900 = vmatprep.subr.bf16.mxu0 %v580
  %901 = vmatpush1.bf16.msra.mxu0 %v579
  %902 = vmatprep.subr.bf16.mxu0 %v584
  %903 = vmatpush1.bf16.msra.mxu0 %v583
  %904 = vmatprep.subr.bf16.mxu0 0
  %905 = vmatpush1.bf16.msra.mxu0 0
  %906 = vmatprep.subr.bf16.mxu0 0
  %907 = vmatpush1.bf16.msra.mxu0 0
  %908 = vmatprep.subr.bf16.mxu0 0
  %909 = vmatpush1.bf16.msra.mxu0 0
  %910 = vmatprep.subr.bf16.mxu0 0
  %911 = vmatpush1.bf16.msra.mxu0 0
  %912 = vmatprep.subr.bf16.mxu0 0
  %913 = vmatpush1.bf16.msra.mxu0 0
  %914 = vmatprep.subr.bf16.mxu0 0
  %915 = vmatpush1.bf16.msra.mxu0 0
  %916 = vmatprep.subr.bf16.mxu0 0
  %917 = vmatpush1.bf16.msra.mxu0 0
  %918 = vmatprep.subr.bf16.mxu0 0
  %919 = vmatpush1.bf16.msra.mxu0 0
  %920 = vmatprep.mubr.bf16.mxu0 0
  %921 = vmatmul.mubr.bf16.gmra.mrb[0].mxu0 %v846
  %v922 = vpop.f32.mrb[0].mxu0
  %v923 = vadd.f32 0.0, %v922
  %v924 = vpop.f32.mrb[0].mxu0
  %v925 = vadd.f32 0.0, %v924
  %v926 = vpop.f32.mrb[0].mxu0
  %v927 = vpop.f32.mrb[0].mxu0
  %928 = vdwg.mxu0
  %v929 = vadd.f32 %v843, %v882
  %v930 = vadd.f32 %v844, %v884
  %v931 = vxor.u32 %v929, 2147483648
  %v932 = vxor.u32 %v930, 2147483648
  %v933 = vmul.f32 %v931, 1.442695
  %v934 = vpow.pop %v933
  %v935 = vmul.f32 %v932, 1.442695
  %v936 = vpow.pop %v935
  %v937 = vadd.f32 %v934, 1.0
  %v938 = vadd.f32 %v936, 1.0
  %v939 = vrcp.pop %v937
  %v940 = vmul.f32 1.0, %v939
  %v941 = vrcp.pop %v938
  %v942 = vmul.f32 1.0, %v941
  %v943 = vadd.f32 %v845, %v925
  %v944 = vadd.f32 %v923, %v417
  %v945 = vmul.f32 %v940, %v944
  %v946 = vadd.f32 %v943, %v945
  %v947 = vtanh.pop %v946
  %v948 = vsub.f32 %v839, %v947
  %v949 = vmul.f32 %v942, %v948
  %v950 = vadd.f32 %v947, %v949
  %vm951 = vcmp.le.s32.totalorder %v406, 2
  %vm952 = vcmp.gt.s32.totalorder %v411, 2
  %vm953 = vmand %vm951, %vm952
  %v954 = vsel %vm953, %v950, %v839
  %s955 = smul.u32 3, 3
  %s956 = smul.addr %s955, 8
  %s957 = scalar_lea.vmem [#allocation2], %s956
  %v958 = vld [vmem:[%s957] sm:$0xff]
  %v959 = vld [vmem:[%s957 + $0x8] sm:$0xff]
  %v960 = vld [vmem:[%s957 + $0x10] sm:$0xff]
  %v961 = vpack.c.bf16 %v954, %v954
  %962 = vmatprep.subr.bf16.mxu0 %v554
  %963 = vmatpush1.bf16.msra.mxu0 %v553
  %964 = vmatprep.subr.bf16.mxu0 %v558
  %965 = vmatpush1.bf16.msra.mxu0 %v557
  %966 = vmatprep.subr.bf16.mxu0 %v562
  %967 = vmatpush1.bf16.msra.mxu0 %v561
  %968 = vmatprep.subr.bf16.mxu0 %v566
  %969 = vmatpush1.bf16.msra.mxu0 %v565
  %970 = vmatprep.subr.bf16.mxu0 %v570
  %971 = vmatpush1.bf16.msra.mxu0 %v569
  %972 = vmatprep.subr.bf16.mxu0 %v574
  %973 = vmatpush1.bf16.msra.mxu0 %v573
  %974 = vmatprep.subr.bf16.mxu0 %v578
  %975 = vmatpush1.bf16.msra.mxu0 %v577
  %976 = vmatprep.subr.bf16.mxu0 %v582
  %977 = vmatpush1.bf16.msra.mxu0 %v581
  %978 = vmatprep.subr.bf16.mxu0 0
  %979 = vmatpush1.bf16.msra.mxu0 0
  %980 = vmatprep.subr.bf16.mxu0 0
  %981 = vmatpush1.bf16.msra.mxu0 0
  %982 = vmatprep.subr.bf16.mxu0 0
  %983 = vmatpush1.bf16.msra.mxu0 0
  %984 = vmatprep.subr.bf16.mxu0 0
  %985 = vmatpush1.bf16.msra.mxu0 0
  %986 = vmatprep.subr.bf16.mxu0 0
  %987 = vmatpush1.bf16.msra.mxu0 0
  %988 = vmatprep.subr.bf16.mxu0 0
  %989 = vmatpush1.bf16.msra.mxu0 0
  %990 = vmatprep.subr.bf16.mxu0 0
  %991 = vmatpush1.bf16.msra.mxu0 0
  %992 = vmatprep.subr.bf16.mxu0 0
  %993 = vmatpush1.bf16.msra.mxu0 0
  %994 = vmatprep.mubr.bf16.mxu0 0
  %995 = vmatmul.mubr.bf16.gmra.mrb[0].mxu0 %v961
  %v996 = vpop.f32.mrb[0].mxu0
  %v997 = vadd.f32 0.0, %v996
  %v998 = vpop.f32.mrb[0].mxu0
  %v999 = vadd.f32 0.0, %v998
  %v1000 = vpop.f32.mrb[0].mxu0
  %v1001 = vpop.f32.mrb[0].mxu0
  %1002 = vdwg.mxu0
  %1003 = vmatprep.subr.bf16.mxu0 %v556
  %1004 = vmatpush1.bf16.msra.mxu0 %v555
  %1005 = vmatprep.subr.bf16.mxu0 %v560
  %1006 = vmatpush1.bf16.msra.mxu0 %v559
  %1007 = vmatprep.subr.bf16.mxu0 %v564
  %1008 = vmatpush1.bf16.msra.mxu0 %v563
  %1009 = vmatprep.subr.bf16.mxu0 %v568
  %1010 = vmatpush1.bf16.msra.mxu0 %v567
  %1011 = vmatprep.subr.bf16.mxu0 %v572
  %1012 = vmatpush1.bf16.msra.mxu0 %v571
  %1013 = vmatprep.subr.bf16.mxu0 %v576
  %1014 = vmatpush1.bf16.msra.mxu0 %v575
  %1015 = vmatprep.subr.bf16.mxu0 %v580
  %1016 = vmatpush1.bf16.msra.mxu0 %v579
  %1017 = vmatprep.subr.bf16.mxu0 %v584
  %1018 = vmatpush1.bf16.msra.mxu0 %v583
  %1019 = vmatprep.subr.bf16.mxu0 0
  %1020 = vmatpush1.bf16.msra.mxu0 0
  %1021 = vmatprep.subr.bf16.mxu0 0
  %1022 = vmatpush1.bf16.msra.mxu0 0
  %1023 = vmatprep.subr.bf16.mxu0 0
  %1024 = vmatpush1.bf16.msra.mxu0 0
  %1025 = vmatprep.subr.bf16.mxu0 0
  %1026 = vmatpush1.bf16.msra.mxu0 0
  %1027 = vmatprep.subr.bf16.mxu0 0
  %1028 = vmatpush1.bf16.msra.mxu0 0
  %1029 = vmatprep.subr.bf16.mxu0 0
  %1030 = vmatpush1.bf16.msra.mxu0 0
  %1031 = vmatprep.subr.bf16.mxu0 0
  %1032 = vmatpush1.bf16.msra.mxu0 0
  %1033 = vmatprep.subr.bf16.mxu0 0
  %1034 = vmatpush1.bf16.msra.mxu0 0
  %1035 = vmatprep.mubr.bf16.mxu0 0
  %1036 = vmatmul.mubr.bf16.gmra.mrb[0].mxu0 %v961
  %v1037 = vpop.f32.mrb[0].mxu0
  %v1038 = vadd.f32 0.0, %v1037
  %v1039 = vpop.f32.mrb[0].mxu0
  %v1040 = vadd.f32 0.0, %v1039
  %v1041 = vpop.f32.mrb[0].mxu0
  %v1042 = vpop.f32.mrb[0].mxu0
  %1043 = vdwg.mxu0
  %v1044 = vadd.f32 %v958, %v997
  %v1045 = vadd.f32 %v959, %v999
  %v1046 = vxor.u32 %v1044, 2147483648
  %v1047 = vxor.u32 %v1045, 2147483648
  %v1048 = vmul.f32 %v1046, 1.442695
  %v1049 = vpow.pop %v1048
  %v1050 = vmul.f32 %v1047, 1.442695
  %v1051 = vpow.pop %v1050
  %v1052 = vadd.f32 %v1049, 1.0
  %v1053 = vadd.f32 %v1051, 1.0
  %v1054 = vrcp.pop %v1052
  %v1055 = vmul.f32 1.0, %v1054
  %v1056 = vrcp.pop %v1053
  %v1057 = vmul.f32 1.0, %v1056
  %v1058 = vadd.f32 %v960, %v1040
  %v1059 = vadd.f32 %v1038, %v417
  %v1060 = vmul.f32 %v1055, %v1059
  %v1061 = vadd.f32 %v1058, %v1060
  %v1062 = vtanh.pop %v1061
  %v1063 = vsub.f32 %v954, %v1062
  %v1064 = vmul.f32 %v1057, %v1063
  %v1065 = vadd.f32 %v1062, %v1064
  %vm1066 = vcmp.le.s32.totalorder %v406, 3
  %vm1067 = vcmp.gt.s32.totalorder %v411, 3
  %vm1068 = vmand %vm1066, %vm1067
  %v1069 = vsel %vm1068, %v1065, %v954
  %s1070 = smul.u32 4, 3
  %s1071 = smul.addr %s1070, 8
  %s1072 = scalar_lea.vmem [#allocation2], %s1071
  %v1073 = vld [vmem:[%s1072] sm:$0xff]
  %v1074 = vld [vmem:[%s1072 + $0x8] sm:$0xff]
  %v1075 = vld [vmem:[%s1072 + $0x10] sm:$0xff]
  %v1076 = vpack.c.bf16 %v1069, %v1069
  %1077 = vmatprep.subr.bf16.mxu0 %v554
  %1078 = vmatpush1.bf16.msra.mxu0 %v553
  %1079 = vmatprep.subr.bf16.mxu0 %v558
  %1080 = vmatpush1.bf16.msra.mxu0 %v557
  %1081 = vmatprep.subr.bf16.mxu0 %v562
  %1082 = vmatpush1.bf16.msra.mxu0 %v561
  %1083 = vmatprep.subr.bf16.mxu0 %v566
  %1084 = vmatpush1.bf16.msra.mxu0 %v565
  %1085 = vmatprep.subr.bf16.mxu0 %v570
  %1086 = vmatpush1.bf16.msra.mxu0 %v569
  %1087 = vmatprep.subr.bf16.mxu0 %v574
  %1088 = vmatpush1.bf16.msra.mxu0 %v573
  %1089 = vmatprep.subr.bf16.mxu0 %v578
  %1090 = vmatpush1.bf16.msra.mxu0 %v577
  %1091 = vmatprep.subr.bf16.mxu0 %v582
  %1092 = vmatpush1.bf16.msra.mxu0 %v581
  %1093 = vmatprep.subr.bf16.mxu0 0
  %1094 = vmatpush1.bf16.msra.mxu0 0
  %1095 = vmatprep.subr.bf16.mxu0 0
  %1096 = vmatpush1.bf16.msra.mxu0 0
  %1097 = vmatprep.subr.bf16.mxu0 0
  %1098 = vmatpush1.bf16.msra.mxu0 0
  %1099 = vmatprep.subr.bf16.mxu0 0
  %1100 = vmatpush1.bf16.msra.mxu0 0
  %1101 = vmatprep.subr.bf16.mxu0 0
  %1102 = vmatpush1.bf16.msra.mxu0 0
  %1103 = vmatprep.subr.bf16.mxu0 0
  %1104 = vmatpush1.bf16.msra.mxu0 0
  %1105 = vmatprep.subr.bf16.mxu0 0
  %1106 = vmatpush1.bf16.msra.mxu0 0
  %1107 = vmatprep.subr.bf16.mxu0 0
  %1108 = vmatpush1.bf16.msra.mxu0 0
  %1109 = vmatprep.mubr.bf16.mxu0 0
  %1110 = vmatmul.mubr.bf16.gmra.mrb[0].mxu0 %v1076
  %v1111 = vpop.f32.mrb[0].mxu0
  %v1112 = vadd.f32 0.0, %v1111
  %v1113 = vpop.f32.mrb[0].mxu0
  %v1114 = vadd.f32 0.0, %v1113
  %v1115 = vpop.f32.mrb[0].mxu0
  %v1116 = vpop.f32.mrb[0].mxu0
  %1117 = vdwg.mxu0
  %1118 = vmatprep.subr.bf16.mxu0 %v556
  %1119 = vmatpush1.bf16.msra.mxu0 %v555
  %1120 = vmatprep.subr.bf16.mxu0 %v560
  %1121 = vmatpush1.bf16.msra.mxu0 %v559
  %1122 = vmatprep.subr.bf16.mxu0 %v564
  %1123 = vmatpush1.bf16.msra.mxu0 %v563
  %1124 = vmatprep.subr.bf16.mxu0 %v568
  %1125 = vmatpush1.bf16.msra.mxu0 %v567
  %1126 = vmatprep.subr.bf16.mxu0 %v572
  %1127 = vmatpush1.bf16.msra.mxu0 %v571
  %1128 = vmatprep.subr.bf16.mxu0 %v576
  %1129 = vmatpush1.bf16.msra.mxu0 %v575
  %1130 = vmatprep.subr.bf16.mxu0 %v580
  %1131 = vmatpush1.bf16.msra.mxu0 %v579
  %1132 = vmatprep.subr.bf16.mxu0 %v584
  %1133 = vmatpush1.bf16.msra.mxu0 %v583
  %1134 = vmatprep.subr.bf16.mxu0 0
  %1135 = vmatpush1.bf16.msra.mxu0 0
  %1136 = vmatprep.subr.bf16.mxu0 0
  %1137 = vmatpush1.bf16.msra.mxu0 0
  %1138 = vmatprep.subr.bf16.mxu0 0
  %1139 = vmatpush1.bf16.msra.mxu0 0
  %1140 = vmatprep.subr.bf16.mxu0 0
  %1141 = vmatpush1.bf16.msra.mxu0 0
  %1142 = vmatprep.subr.bf16.mxu0 0
  %1143 = vmatpush1.bf16.msra.mxu0 0
  %1144 = vmatprep.subr.bf16.mxu0 0
  %1145 = vmatpush1.bf16.msra.mxu0 0
  %1146 = vmatprep.subr.bf16.mxu0 0
  %1147 = vmatpush1.bf16.msra.mxu0 0
  %1148 = vmatprep.subr.bf16.mxu0 0
  %1149 = vmatpush1.bf16.msra.mxu0 0
  %1150 = vmatprep.mubr.bf16.mxu0 0
  %1151 = vmatmul.mubr.bf16.gmra.mrb[0].mxu0 %v1076
  %v1152 = vpop.f32.mrb[0].mxu0
  %v1153 = vadd.f32 0.0, %v1152
  %v1154 = vpop.f32.mrb[0].mxu0
  %v1155 = vadd.f32 0.0, %v1154
  %v1156 = vpop.f32.mrb[0].mxu0
  %v1157 = vpop.f32.mrb[0].mxu0
  %1158 = vdwg.mxu0
  %v1159 = vadd.f32 %v1073, %v1112
  %v1160 = vadd.f32 %v1074, %v1114
  %v1161 = vxor.u32 %v1159, 2147483648
  %v1162 = vxor.u32 %v1160, 2147483648
  %v1163 = vmul.f32 %v1161, 1.442695
  %v1164 = vpow.pop %v1163
  %v1165 = vmul.f32 %v1162, 1.442695
  %v1166 = vpow.pop %v1165
  %v1167 = vadd.f32 %v1164, 1.0
  %v1168 = vadd.f32 %v1166, 1.0
  %v1169 = vrcp.pop %v1167
  %v1170 = vmul.f32 1.0, %v1169
  %v1171 = vrcp.pop %v1168
  %v1172 = vmul.f32 1.0, %v1171
  %v1173 = vadd.f32 %v1075, %v1155
  %v1174 = vadd.f32 %v1153, %v417
  %v1175 = vmul.f32 %v1170, %v1174
  %v1176 = vadd.f32 %v1173, %v1175
  %v1177 = vtanh.pop %v1176
  %v1178 = vsub.f32 %v1069, %v1177
  %v1179 = vmul.f32 %v1172, %v1178
  %v1180 = vadd.f32 %v1177, %v1179
  %vm1181 = vcmp.le.s32.totalorder %v406, 4
  %vm1182 = vcmp.gt.s32.totalorder %v411, 4
  %vm1183 = vmand %vm1181, %vm1182
  %v1184 = vsel %vm1183, %v1180, %v1069
  %s1185 = smul.u32 5, 3
  %s1186 = smul.addr %s1185, 8
  %s1187 = scalar_lea.vmem [#allocation2], %s1186
  %v1188 = vld [vmem:[%s1187] sm:$0xff]
  %v1189 = vld [vmem:[%s1187 + $0x8] sm:$0xff]
  %v1190 = vld [vmem:[%s1187 + $0x10] sm:$0xff]
  %v1191 = vpack.c.bf16 %v1184, %v1184
  %1192 = vmatprep.subr.bf16.mxu0 %v554
  %1193 = vmatpush1.bf16.msra.mxu0 %v553
  %1194 = vmatprep.subr.bf16.mxu0 %v558
  %1195 = vmatpush1.bf16.msra.mxu0 %v557
  %1196 = vmatprep.subr.bf16.mxu0 %v562
  %1197 = vmatpush1.bf16.msra.mxu0 %v561
  %1198 = vmatprep.subr.bf16.mxu0 %v566
  %1199 = vmatpush1.bf16.msra.mxu0 %v565
  %1200 = vmatprep.subr.bf16.mxu0 %v570
  %1201 = vmatpush1.bf16.msra.mxu0 %v569
  %1202 = vmatprep.subr.bf16.mxu0 %v574
  %1203 = vmatpush1.bf16.msra.mxu0 %v573
  %1204 = vmatprep.subr.bf16.mxu0 %v578
  %1205 = vmatpush1.bf16.msra.mxu0 %v577
  %1206 = vmatprep.subr.bf16.mxu0 %v582
  %1207 = vmatpush1.bf16.msra.mxu0 %v581
  %1208 = vmatprep.subr.bf16.mxu0 0
  %1209 = vmatpush1.bf16.msra.mxu0 0
  %1210 = vmatprep.subr.bf16.mxu0 0
  %1211 = vmatpush1.bf16.msra.mxu0 0
  %1212 = vmatprep.subr.bf16.mxu0 0
  %1213 = vmatpush1.bf16.msra.mxu0 0
  %1214 = vmatprep.subr.bf16.mxu0 0
  %1215 = vmatpush1.bf16.msra.mxu0 0
  %1216 = vmatprep.subr.bf16.mxu0 0
  %1217 = vmatpush1.bf16.msra.mxu0 0
  %1218 = vmatprep.subr.bf16.mxu0 0
  %1219 = vmatpush1.bf16.msra.mxu0 0
  %1220 = vmatprep.subr.bf16.mxu0 0
  %1221 = vmatpush1.bf16.msra.mxu0 0
  %1222 = vmatprep.subr.bf16.mxu0 0
  %1223 = vmatpush1.bf16.msra.mxu0 0
  %1224 = vmatprep.mubr.bf16.mxu0 0
  %1225 = vmatmul.mubr.bf16.gmra.mrb[0].mxu0 %v1191
  %v1226 = vpop.f32.mrb[0].mxu0
  %v1227 = vadd.f32 0.0, %v1226
  %v1228 = vpop.f32.mrb[0].mxu0
  %v1229 = vadd.f32 0.0, %v1228
  %v1230 = vpop.f32.mrb[0].mxu0
  %v1231 = vpop.f32.mrb[0].mxu0
  %1232 = vdwg.mxu0
  %1233 = vmatprep.subr.bf16.mxu0 %v556
  %1234 = vmatpush1.bf16.msra.mxu0 %v555
  %1235 = vmatprep.subr.bf16.mxu0 %v560
  %1236 = vmatpush1.bf16.msra.mxu0 %v559
  %1237 = vmatprep.subr.bf16.mxu0 %v564
  %1238 = vmatpush1.bf16.msra.mxu0 %v563
  %1239 = vmatprep.subr.bf16.mxu0 %v568
  %1240 = vmatpush1.bf16.msra.mxu0 %v567
  %1241 = vmatprep.subr.bf16.mxu0 %v572
  %1242 = vmatpush1.bf16.msra.mxu0 %v571
  %1243 = vmatprep.subr.bf16.mxu0 %v576
  %1244 = vmatpush1.bf16.msra.mxu0 %v575
  %1245 = vmatprep.subr.bf16.mxu0 %v580
  %1246 = vmatpush1.bf16.msra.mxu0 %v579
  %1247 = vmatprep.subr.bf16.mxu0 %v584
  %1248 = vmatpush1.bf16.msra.mxu0 %v583
  %1249 = vmatprep.subr.bf16.mxu0 0
  %1250 = vmatpush1.bf16.msra.mxu0 0
  %1251 = vmatprep.subr.bf16.mxu0 0
  %1252 = vmatpush1.bf16.msra.mxu0 0
  %1253 = vmatprep.subr.bf16.mxu0 0
  %1254 = vmatpush1.bf16.msra.mxu0 0
  %1255 = vmatprep.subr.bf16.mxu0 0
  %1256 = vmatpush1.bf16.msra.mxu0 0
  %1257 = vmatprep.subr.bf16.mxu0 0
  %1258 = vmatpush1.bf16.msra.mxu0 0
  %1259 = vmatprep.subr.bf16.mxu0 0
  %1260 = vmatpush1.bf16.msra.mxu0 0
  %1261 = vmatprep.subr.bf16.mxu0 0
  %1262 = vmatpush1.bf16.msra.mxu0 0
  %1263 = vmatprep.subr.bf16.mxu0 0
  %1264 = vmatpush1.bf16.msra.mxu0 0
  %1265 = vmatprep.mubr.bf16.mxu0 0
  %1266 = vmatmul.mubr.bf16.gmra.mrb[0].mxu0 %v1191
  %v1267 = vpop.f32.mrb[0].mxu0
  %v1268 = vadd.f32 0.0, %v1267
  %v1269 = vpop.f32.mrb[0].mxu0
  %v1270 = vadd.f32 0.0, %v1269
  %v1271 = vpop.f32.mrb[0].mxu0
  %v1272 = vpop.f32.mrb[0].mxu0
  %1273 = vdwg.mxu0
  %v1274 = vadd.f32 %v1188, %v1227
  %v1275 = vadd.f32 %v1189, %v1229
  %v1276 = vxor.u32 %v1274, 2147483648
  %v1277 = vxor.u32 %v1275, 2147483648
  %v1278 = vmul.f32 %v1276, 1.442695
  %v1279 = vpow.pop %v1278
  %v1280 = vmul.f32 %v1277, 1.442695
  %v1281 = vpow.pop %v1280
  %v1282 = vadd.f32 %v1279, 1.0
  %v1283 = vadd.f32 %v1281, 1.0
  %v1284 = vrcp.pop %v1282
  %v1285 = vmul.f32 1.0, %v1284
  %v1286 = vrcp.pop %v1283
  %v1287 = vmul.f32 1.0, %v1286
  %v1288 = vadd.f32 %v1190, %v1270
  %v1289 = vadd.f32 %v1268, %v417
  %v1290 = vmul.f32 %v1285, %v1289
  %v1291 = vadd.f32 %v1288, %v1290
  %v1292 = vtanh.pop %v1291
  %v1293 = vsub.f32 %v1184, %v1292
  %v1294 = vmul.f32 %v1287, %v1293
  %v1295 = vadd.f32 %v1292, %v1294
  %vm1296 = vcmp.le.s32.totalorder %v406, 5
  %vm1297 = vcmp.gt.s32.totalorder %v411, 5
  %vm1298 = vmand %vm1296, %vm1297
  %v1299 = vsel %vm1298, %v1295, %v1184
  %s1300 = smul.u32 6, 3
  %s1301 = smul.addr %s1300, 8
  %s1302 = scalar_lea.vmem [#allocation2], %s1301
  %v1303 = vld [vmem:[%s1302] sm:$0xff]
  %v1304 = vld [vmem:[%s1302 + $0x8] sm:$0xff]
  %v1305 = vld [vmem:[%s1302 + $0x10] sm:$0xff]
  %v1306 = vpack.c.bf16 %v1299, %v1299
  %1307 = vmatprep.subr.bf16.mxu0 %v554
  %1308 = vmatpush1.bf16.msra.mxu0 %v553
  %1309 = vmatprep.subr.bf16.mxu0 %v558
  %1310 = vmatpush1.bf16.msra.mxu0 %v557
  %1311 = vmatprep.subr.bf16.mxu0 %v562
  %1312 = vmatpush1.bf16.msra.mxu0 %v561
  %1313 = vmatprep.subr.bf16.mxu0 %v566
  %1314 = vmatpush1.bf16.msra.mxu0 %v565
  %1315 = vmatprep.subr.bf16.mxu0 %v570
  %1316 = vmatpush1.bf16.msra.mxu0 %v569
  %1317 = vmatprep.subr.bf16.mxu0 %v574
  %1318 = vmatpush1.bf16.msra.mxu0 %v573
  %1319 = vmatprep.subr.bf16.mxu0 %v578
  %1320 = vmatpush1.bf16.msra.mxu0 %v577
  %1321 = vmatprep.subr.bf16.mxu0 %v582
  %1322 = vmatpush1.bf16.msra.mxu0 %v581
  %1323 = vmatprep.subr.bf16.mxu0 0
  %1324 = vmatpush1.bf16.msra.mxu0 0
  %1325 = vmatprep.subr.bf16.mxu0 0
  %1326 = vmatpush1.bf16.msra.mxu0 0
  %1327 = vmatprep.subr.bf16.mxu0 0
  %1328 = vmatpush1.bf16.msra.mxu0 0
  %1329 = vmatprep.subr.bf16.mxu0 0
  %1330 = vmatpush1.bf16.msra.mxu0 0
  %1331 = vmatprep.subr.bf16.mxu0 0
  %1332 = vmatpush1.bf16.msra.mxu0 0
  %1333 = vmatprep.subr.bf16.mxu0 0
  %1334 = vmatpush1.bf16.msra.mxu0 0
  %1335 = vmatprep.subr.bf16.mxu0 0
  %1336 = vmatpush1.bf16.msra.mxu0 0
  %1337 = vmatprep.subr.bf16.mxu0 0
  %1338 = vmatpush1.bf16.msra.mxu0 0
  %1339 = vmatprep.mubr.bf16.mxu0 0
  %1340 = vmatmul.mubr.bf16.gmra.mrb[0].mxu0 %v1306
  %v1341 = vpop.f32.mrb[0].mxu0
  %v1342 = vadd.f32 0.0, %v1341
  %v1343 = vpop.f32.mrb[0].mxu0
  %v1344 = vadd.f32 0.0, %v1343
  %v1345 = vpop.f32.mrb[0].mxu0
  %v1346 = vpop.f32.mrb[0].mxu0
  %1347 = vdwg.mxu0
  %1348 = vmatprep.subr.bf16.mxu0 %v556
  %1349 = vmatpush1.bf16.msra.mxu0 %v555
  %1350 = vmatprep.subr.bf16.mxu0 %v560
  %1351 = vmatpush1.bf16.msra.mxu0 %v559
  %1352 = vmatprep.subr.bf16.mxu0 %v564
  %1353 = vmatpush1.bf16.msra.mxu0 %v563
  %1354 = vmatprep.subr.bf16.mxu0 %v568
  %1355 = vmatpush1.bf16.msra.mxu0 %v567
  %1356 = vmatprep.subr.bf16.mxu0 %v572
  %1357 = vmatpush1.bf16.msra.mxu0 %v571
  %1358 = vmatprep.subr.bf16.mxu0 %v576
  %1359 = vmatpush1.bf16.msra.mxu0 %v575
  %1360 = vmatprep.subr.bf16.mxu0 %v580
  %1361 = vmatpush1.bf16.msra.mxu0 %v579
  %1362 = vmatprep.subr.bf16.mxu0 %v584
  %1363 = vmatpush1.bf16.msra.mxu0 %v583
  %1364 = vmatprep.subr.bf16.mxu0 0
  %1365 = vmatpush1.bf16.msra.mxu0 0
  %1366 = vmatprep.subr.bf16.mxu0 0
  %1367 = vmatpush1.bf16.msra.mxu0 0
  %1368 = vmatprep.subr.bf16.mxu0 0
  %1369 = vmatpush1.bf16.msra.mxu0 0
  %1370 = vmatprep.subr.bf16.mxu0 0
  %1371 = vmatpush1.bf16.msra.mxu0 0
  %1372 = vmatprep.subr.bf16.mxu0 0
  %1373 = vmatpush1.bf16.msra.mxu0 0
  %1374 = vmatprep.subr.bf16.mxu0 0
  %1375 = vmatpush1.bf16.msra.mxu0 0
  %1376 = vmatprep.subr.bf16.mxu0 0
  %1377 = vmatpush1.bf16.msra.mxu0 0
  %1378 = vmatprep.subr.bf16.mxu0 0
  %1379 = vmatpush1.bf16.msra.mxu0 0
  %1380 = vmatprep.mubr.bf16.mxu0 0
  %1381 = vmatmul.mubr.bf16.gmra.mrb[0].mxu0 %v1306
  %v1382 = vpop.f32.mrb[0].mxu0
  %v1383 = vadd.f32 0.0, %v1382
  %v1384 = vpop.f32.mrb[0].mxu0
  %v1385 = vadd.f32 0.0, %v1384
  %v1386 = vpop.f32.mrb[0].mxu0
  %v1387 = vpop.f32.mrb[0].mxu0
  %1388 = vdwg.mxu0
  %v1389 = vadd.f32 %v1303, %v1342
  %v1390 = vadd.f32 %v1304, %v1344
  %v1391 = vxor.u32 %v1389, 2147483648
  %v1392 = vxor.u32 %v1390, 2147483648
  %v1393 = vmul.f32 %v1391, 1.442695
  %v1394 = vpow.pop %v1393
  %v1395 = vmul.f32 %v1392, 1.442695
  %v1396 = vpow.pop %v1395
  %v1397 = vadd.f32 %v1394, 1.0
  %v1398 = vadd.f32 %v1396, 1.0
  %v1399 = vrcp.pop %v1397
  %v1400 = vmul.f32 1.0, %v1399
  %v1401 = vrcp.pop %v1398
  %v1402 = vmul.f32 1.0, %v1401
  %v1403 = vadd.f32 %v1305, %v1385
  %v1404 = vadd.f32 %v1383, %v417
  %v1405 = vmul.f32 %v1400, %v1404
  %v1406 = vadd.f32 %v1403, %v1405
  %v1407 = vtanh.pop %v1406
  %v1408 = vsub.f32 %v1299, %v1407
  %v1409 = vmul.f32 %v1402, %v1408
  %v1410 = vadd.f32 %v1407, %v1409
  %vm1411 = vcmp.le.s32.totalorder %v406, 6
  %vm1412 = vcmp.gt.s32.totalorder %v411, 6
  %vm1413 = vmand %vm1411, %vm1412
  %v1414 = vsel %vm1413, %v1410, %v1299
  %s1415 = smul.u32 7, 3
  %s1416 = smul.addr %s1415, 8
  %s1417 = scalar_lea.vmem [#allocation2], %s1416
  %v1418 = vld [vmem:[%s1417] sm:$0xff]
  %v1419 = vld [vmem:[%s1417 + $0x8] sm:$0xff]
  %v1420 = vld [vmem:[%s1417 + $0x10] sm:$0xff]
  %v1421 = vpack.c.bf16 %v1414, %v1414
  %1422 = vmatprep.subr.bf16.mxu0 %v554
  %1423 = vmatpush1.bf16.msra.mxu0 %v553
  %1424 = vmatprep.subr.bf16.mxu0 %v558
  %1425 = vmatpush1.bf16.msra.mxu0 %v557
  %1426 = vmatprep.subr.bf16.mxu0 %v562
  %1427 = vmatpush1.bf16.msra.mxu0 %v561
  %1428 = vmatprep.subr.bf16.mxu0 %v566
  %1429 = vmatpush1.bf16.msra.mxu0 %v565
  %1430 = vmatprep.subr.bf16.mxu0 %v570
  %1431 = vmatpush1.bf16.msra.mxu0 %v569
  %1432 = vmatprep.subr.bf16.mxu0 %v574
  %1433 = vmatpush1.bf16.msra.mxu0 %v573
  %1434 = vmatprep.subr.bf16.mxu0 %v578
  %1435 = vmatpush1.bf16.msra.mxu0 %v577
  %1436 = vmatprep.subr.bf16.mxu0 %v582
  %1437 = vmatpush1.bf16.msra.mxu0 %v581
  %1438 = vmatprep.subr.bf16.mxu0 0
  %1439 = vmatpush1.bf16.msra.mxu0 0
  %1440 = vmatprep.subr.bf16.mxu0 0
  %1441 = vmatpush1.bf16.msra.mxu0 0
  %1442 = vmatprep.subr.bf16.mxu0 0
  %1443 = vmatpush1.bf16.msra.mxu0 0
  %1444 = vmatprep.subr.bf16.mxu0 0
  %1445 = vmatpush1.bf16.msra.mxu0 0
  %1446 = vmatprep.subr.bf16.mxu0 0
  %1447 = vmatpush1.bf16.msra.mxu0 0
  %1448 = vmatprep.subr.bf16.mxu0 0
  %1449 = vmatpush1.bf16.msra.mxu0 0
  %1450 = vmatprep.subr.bf16.mxu0 0
  %1451 = vmatpush1.bf16.msra.mxu0 0
  %1452 = vmatprep.subr.bf16.mxu0 0
  %1453 = vmatpush1.bf16.msra.mxu0 0
  %1454 = vmatprep.mubr.bf16.mxu0 0
  %1455 = vmatmul.mubr.bf16.gmra.mrb[0].mxu0 %v1421
  %v1456 = vpop.f32.mrb[0].mxu0
  %v1457 = vadd.f32 0.0, %v1456
  %v1458 = vpop.f32.mrb[0].mxu0
  %v1459 = vadd.f32 0.0, %v1458
  %v1460 = vpop.f32.mrb[0].mxu0
  %v1461 = vpop.f32.mrb[0].mxu0
  %1462 = vdwg.mxu0
  %1463 = vmatprep.subr.bf16.mxu0 %v556
  %1464 = vmatpush1.bf16.msra.mxu0 %v555
  %1465 = vmatprep.subr.bf16.mxu0 %v560
  %1466 = vmatpush1.bf16.msra.mxu0 %v559
  %1467 = vmatprep.subr.bf16.mxu0 %v564
  %1468 = vmatpush1.bf16.msra.mxu0 %v563
  %1469 = vmatprep.subr.bf16.mxu0 %v568
  %1470 = vmatpush1.bf16.msra.mxu0 %v567
  %1471 = vmatprep.subr.bf16.mxu0 %v572
  %1472 = vmatpush1.bf16.msra.mxu0 %v571
  %1473 = vmatprep.subr.bf16.mxu0 %v576
  %1474 = vmatpush1.bf16.msra.mxu0 %v575
  %1475 = vmatprep.subr.bf16.mxu0 %v580
  %1476 = vmatpush1.bf16.msra.mxu0 %v579
  %1477 = vmatprep.subr.bf16.mxu0 %v584
  %1478 = vmatpush1.bf16.msra.mxu0 %v583
  %1479 = vmatprep.subr.bf16.mxu0 0
  %1480 = vmatpush1.bf16.msra.mxu0 0
  %1481 = vmatprep.subr.bf16.mxu0 0
  %1482 = vmatpush1.bf16.msra.mxu0 0
  %1483 = vmatprep.subr.bf16.mxu0 0
  %1484 = vmatpush1.bf16.msra.mxu0 0
  %1485 = vmatprep.subr.bf16.mxu0 0
  %1486 = vmatpush1.bf16.msra.mxu0 0
  %1487 = vmatprep.subr.bf16.mxu0 0
  %1488 = vmatpush1.bf16.msra.mxu0 0
  %1489 = vmatprep.subr.bf16.mxu0 0
  %1490 = vmatpush1.bf16.msra.mxu0 0
  %1491 = vmatprep.subr.bf16.mxu0 0
  %1492 = vmatpush1.bf16.msra.mxu0 0
  %1493 = vmatprep.subr.bf16.mxu0 0
  %1494 = vmatpush1.bf16.msra.mxu0 0
  %1495 = vmatprep.mubr.bf16.mxu0 0
  %1496 = vmatmul.mubr.bf16.gmra.mrb[0].mxu0 %v1421
  %v1497 = vpop.f32.mrb[0].mxu0
  %v1498 = vadd.f32 0.0, %v1497
  %v1499 = vpop.f32.mrb[0].mxu0
  %v1500 = vadd.f32 0.0, %v1499
  %v1501 = vpop.f32.mrb[0].mxu0
  %v1502 = vpop.f32.mrb[0].mxu0
  %1503 = vdwg.mxu0
  %v1504 = vadd.f32 %v1418, %v1457
  %v1505 = vadd.f32 %v1419, %v1459
  %v1506 = vxor.u32 %v1504, 2147483648
  %v1507 = vxor.u32 %v1505, 2147483648
  %v1508 = vmul.f32 %v1506, 1.442695
  %v1509 = vpow.pop %v1508
  %v1510 = vmul.f32 %v1507, 1.442695
  %v1511 = vpow.pop %v1510
  %v1512 = vadd.f32 %v1509, 1.0
  %v1513 = vadd.f32 %v1511, 1.0
  %v1514 = vrcp.pop %v1512
  %v1515 = vmul.f32 1.0, %v1514
  %v1516 = vrcp.pop %v1513
  %v1517 = vmul.f32 1.0, %v1516
  %v1518 = vadd.f32 %v1420, %v1500
  %v1519 = vadd.f32 %v1498, %v417
  %v1520 = vmul.f32 %v1515, %v1519
  %v1521 = vadd.f32 %v1518, %v1520
  %v1522 = vtanh.pop %v1521
  %v1523 = vsub.f32 %v1414, %v1522
  %v1524 = vmul.f32 %v1517, %v1523
  %v1525 = vadd.f32 %v1522, %v1524
  %vm1526 = vcmp.le.s32.totalorder %v406, 7
  %vm1527 = vcmp.gt.s32.totalorder %v411, 7
  %vm1528 = vmand %vm1526, %vm1527
  %v1529 = vsel %vm1528, %v1525, %v1414
  %v1530 = vpack.c.bf16 %v1529, %v1529
  %1531 = vmatprep.subr.bf16.mxu0 %v554
  %1532 = vmatpush1.bf16.msra.mxu0 %v553
  %1533 = vmatprep.subr.bf16.mxu0 %v558
  %1534 = vmatpush1.bf16.msra.mxu0 %v557
  %1535 = vmatprep.subr.bf16.mxu0 %v562
  %1536 = vmatpush1.bf16.msra.mxu0 %v561
  %1537 = vmatprep.subr.bf16.mxu0 %v566
  %1538 = vmatpush1.bf16.msra.mxu0 %v565
  %1539 = vmatprep.subr.bf16.mxu0 %v570
  %1540 = vmatpush1.bf16.msra.mxu0 %v569
  %1541 = vmatprep.subr.bf16.mxu0 %v574
  %1542 = vmatpush1.bf16.msra.mxu0 %v573
  %1543 = vmatprep.subr.bf16.mxu0 %v578
  %1544 = vmatpush1.bf16.msra.mxu0 %v577
  %1545 = vmatprep.subr.bf16.mxu0 %v582
  %1546 = vmatpush1.bf16.msra.mxu0 %v581
  %1547 = vmatprep.subr.bf16.mxu0 0
  %1548 = vmatpush1.bf16.msra.mxu0 0
  %1549 = vmatprep.subr.bf16.mxu0 0
  %1550 = vmatpush1.bf16.msra.mxu0 0
  %1551 = vmatprep.subr.bf16.mxu0 0
  %1552 = vmatpush1.bf16.msra.mxu0 0
  %1553 = vmatprep.subr.bf16.mxu0 0
  %1554 = vmatpush1.bf16.msra.mxu0 0
  %1555 = vmatprep.subr.bf16.mxu0 0
  %1556 = vmatpush1.bf16.msra.mxu0 0
  %1557 = vmatprep.subr.bf16.mxu0 0
  %1558 = vmatpush1.bf16.msra.mxu0 0
  %1559 = vmatprep.subr.bf16.mxu0 0
  %1560 = vmatpush1.bf16.msra.mxu0 0
  %1561 = vmatprep.subr.bf16.mxu0 0
  %1562 = vmatpush1.bf16.msra.mxu0 0
  %1563 = vmatprep.mubr.bf16.mxu0 0
  %1564 = vmatmul.mubr.bf16.gmra.mrb[0].mxu0 %v1530
  %v1565 = vpop.f32.mrb[0].mxu0
  %v1566 = vadd.f32 0.0, %v1565
  %v1567 = vpop.f32.mrb[0].mxu0
  %v1568 = vadd.f32 0.0, %v1567
  %v1569 = vpop.f32.mrb[0].mxu0
  %v1570 = vpop.f32.mrb[0].mxu0
  %1571 = vdwg.mxu0
  %1572 = vmatprep.subr.bf16.mxu0 %v556
  %1573 = vmatpush1.bf16.msra.mxu0 %v555
  %1574 = vmatprep.subr.bf16.mxu0 %v560
  %1575 = vmatpush1.bf16.msra.mxu0 %v559
  %1576 = vmatprep.subr.bf16.mxu0 %v564
  %1577 = vmatpush1.bf16.msra.mxu0 %v563
  %1578 = vmatprep.subr.bf16.mxu0 %v568
  %1579 = vmatpush1.bf16.msra.mxu0 %v567
  %1580 = vmatprep.subr.bf16.mxu0 %v572
  %1581 = vmatpush1.bf16.msra.mxu0 %v571
  %1582 = vmatprep.subr.bf16.mxu0 %v576
  %1583 = vmatpush1.bf16.msra.mxu0 %v575
  %1584 = vmatprep.subr.bf16.mxu0 %v580
  %1585 = vmatpush1.bf16.msra.mxu0 %v579
  %1586 = vmatprep.subr.bf16.mxu0 %v584
  %1587 = vmatpush1.bf16.msra.mxu0 %v583
  %1588 = vmatprep.subr.bf16.mxu0 0
  %1589 = vmatpush1.bf16.msra.mxu0 0
  %1590 = vmatprep.subr.bf16.mxu0 0
  %1591 = vmatpush1.bf16.msra.mxu0 0
  %1592 = vmatprep.subr.bf16.mxu0 0
  %1593 = vmatpush1.bf16.msra.mxu0 0
  %1594 = vmatprep.subr.bf16.mxu0 0
  %1595 = vmatpush1.bf16.msra.mxu0 0
  %1596 = vmatprep.subr.bf16.mxu0 0
  %1597 = vmatpush1.bf16.msra.mxu0 0
  %1598 = vmatprep.subr.bf16.mxu0 0
  %1599 = vmatpush1.bf16.msra.mxu0 0
  %1600 = vmatprep.subr.bf16.mxu0 0
  %1601 = vmatpush1.bf16.msra.mxu0 0
  %1602 = vmatprep.subr.bf16.mxu0 0
  %1603 = vmatpush1.bf16.msra.mxu0 0
  %1604 = vmatprep.mubr.bf16.mxu0 0
  %1605 = vmatmul.mubr.bf16.gmra.mrb[0].mxu0 %v1530
  %v1606 = vpop.f32.mrb[0].mxu0
  %v1607 = vadd.f32 0.0, %v1606
  %v1608 = vpop.f32.mrb[0].mxu0
  %v1609 = vadd.f32 0.0, %v1608
  %v1610 = vpop.f32.mrb[0].mxu0
  %v1611 = vpop.f32.mrb[0].mxu0
  %1612 = vdwg.mxu0
  %v1613 = vadd.f32 %v1418, %v1566
  %v1614 = vadd.f32 %v1419, %v1568
  %v1615 = vxor.u32 %v1613, 2147483648
  %v1616 = vxor.u32 %v1614, 2147483648
  %v1617 = vmul.f32 %v1615, 1.442695
  %v1618 = vpow.pop %v1617
  %v1619 = vmul.f32 %v1616, 1.442695
  %v1620 = vpow.pop %v1619
  %v1621 = vadd.f32 %v1618, 1.0
  %v1622 = vadd.f32 %v1620, 1.0
  %v1623 = vrcp.pop %v1621
  %v1624 = vmul.f32 1.0, %v1623
  %v1625 = vrcp.pop %v1622
  %v1626 = vmul.f32 1.0, %v1625
  %v1627 = vadd.f32 %v1420, %v1609
  %v1628 = vadd.f32 %v1607, %v417
  %v1629 = vmul.f32 %v1624, %v1628
  %v1630 = vadd.f32 %v1627, %v1629
  %v1631 = vtanh.pop %v1630
  %v1632 = vsub.f32 %v1529, %v1631
  %v1633 = vmul.f32 %v1626, %v1632
  %v1634 = vadd.f32 %v1631, %v1633
  %vm1635 = vcmp.le.s32.totalorder %v406, 8
  %vm1636 = vcmp.gt.s32.totalorder %v411, 8
  %vm1637 = vmand %vm1635, %vm1636
  %v1638 = vsel %vm1637, %v1634, %v1529
  %v1639 = vld [vmem:[%s6] sm:$0xff]
  %v1640 = vld [vmem:[%s6 + $0x8] sm:$0xff]
  %v1641 = vld [vmem:[%s6 + $0x10] sm:$0xff]
  %v1642 = vld [vmem:[%s6 + $0x18] sm:$0xff]
  %v1643 = vld [vmem:[%s6 + $0x20] sm:$0xff]
  %v1644 = vld [vmem:[%s6 + $0x28] sm:$0xff]
  %v1645 = vld [vmem:[%s6 + $0x30] sm:$0xff]
  %v1646 = vld [vmem:[%s6 + $0x38] sm:$0xff]
  %v1647 = vld [vmem:[%s6 + $0x40] sm:$0xff]
  %v1648 = vld [vmem:[%s6 + $0x48] sm:$0xff]
  %v1649 = vld [vmem:[%s6 + $0x50] sm:$0xff]
  %v1650 = vld [vmem:[%s6 + $0x58] sm:$0xff]
  %v1651 = vld [vmem:[%s6 + $0x60] sm:$0xff]
  %v1652 = vld [vmem:[%s6 + $0x68] sm:$0xff]
  %v1653 = vld [vmem:[%s6 + $0x70] sm:$0xff]
  %v1654 = vld [vmem:[%s6 + $0x78] sm:$0xff]
  %v1655 = vld [vmem:[#allocation3] sm:$0x1]
  %v1657 = vlaneseq
  %v1658 = vshrl.u32 %v1657, 7
  %v1659 = vsub.s32 0, %v1658
  %v1660 = vrot.slane %v1655, %v1659
  %1662 = vmatprep.subr.mxu0 0.0
  %1663 = vmatpush1.msra.mxu0 %v1639
  %1664 = vmatprep.subr.mxu0 0.0
  %1665 = vmatpush1.msra.mxu0 %v1640
  %1666 = vmatprep.subr.mxu0 0.0
  %1667 = vmatpush1.msra.mxu0 %v1641
  %1668 = vmatprep.subr.mxu0 0.0
  %1669 = vmatpush1.msra.mxu0 %v1642
  %1670 = vmatprep.subr.mxu0 0.0
  %1671 = vmatpush1.msra.mxu0 %v1643
  %1672 = vmatprep.subr.mxu0 0.0
  %1673 = vmatpush1.msra.mxu0 %v1644
  %1674 = vmatprep.subr.mxu0 0.0
  %1675 = vmatpush1.msra.mxu0 %v1645
  %1676 = vmatprep.subr.mxu0 0.0
  %1677 = vmatpush1.msra.mxu0 %v1646
  %1678 = vmatprep.subr.mxu0 0.0
  %1679 = vmatpush1.msra.mxu0 %v1647
  %1680 = vmatprep.subr.mxu0 0.0
  %1681 = vmatpush1.msra.mxu0 %v1648
  %1682 = vmatprep.subr.mxu0 0.0
  %1683 = vmatpush1.msra.mxu0 %v1649
  %1684 = vmatprep.subr.mxu0 0.0
  %1685 = vmatpush1.msra.mxu0 %v1650
  %1686 = vmatprep.subr.mxu0 0.0
  %1687 = vmatpush1.msra.mxu0 %v1651
  %1688 = vmatprep.subr.mxu0 0.0
  %1689 = vmatpush1.msra.mxu0 %v1652
  %1690 = vmatprep.subr.mxu0 0.0
  %1691 = vmatpush1.msra.mxu0 %v1653
  %1692 = vmatprep.subr.mxu0 0.0
  %1693 = vmatpush1.msra.mxu0 %v1654
  %1694 = vmatprep.subr.mxu0 0.0
  %1695 = vmatpush1.msra.mxu0 0.0
  %1696 = vmatprep.subr.mxu0 0.0
  %1697 = vmatpush1.msra.mxu0 0.0
  %1698 = vmatprep.subr.mxu0 0.0
  %1699 = vmatpush1.msra.mxu0 0.0
  %1700 = vmatprep.subr.mxu0 0.0
  %1701 = vmatpush1.msra.mxu0 0.0
  %1702 = vmatprep.subr.mxu0 0.0
  %1703 = vmatpush1.msra.mxu0 0.0
  %1704 = vmatprep.subr.mxu0 0.0
  %1705 = vmatpush1.msra.mxu0 0.0
  %1706 = vmatprep.subr.mxu0 0.0
  %1707 = vmatpush1.msra.mxu0 0.0
  %1708 = vmatprep.subr.mxu0 0.0
  %1709 = vmatpush1.msra.mxu0 0.0
  %1710 = vmatprep.subr.mxu0 0.0
  %1711 = vmatpush1.msra.mxu0 0.0
  %1712 = vmatprep.subr.mxu0 0.0
  %1713 = vmatpush1.msra.mxu0 0.0
  %1714 = vmatprep.subr.mxu0 0.0
  %1715 = vmatpush1.msra.mxu0 0.0
  %1716 = vmatprep.subr.mxu0 0.0
  %1717 = vmatpush1.msra.mxu0 0.0
  %1718 = vmatprep.subr.mxu0 0.0
  %1719 = vmatpush1.msra.mxu0 0.0
  %1720 = vmatprep.subr.mxu0 0.0
  %1721 = vmatpush1.msra.mxu0 0.0
  %1722 = vmatprep.subr.mxu0 0.0
  %1723 = vmatpush1.msra.mxu0 0.0
  %1724 = vmatprep.subr.mxu0 0.0
  %1725 = vmatpush1.msra.mxu0 0.0
  %1726 = vmatprep.mubr.f32.mxu0 0.0
  %1727 = vmatmul.mubr.f32.gmra.mrb[0].mxu0 %v1638
  %v1728 = vpop.f32.mrb[0].mxu0
  %v1729 = vadd.f32 %v1660, %v1728
  %v1730 = vpop.f32.mrb[0].mxu0
  %1731 = vdwg.mxu0
  %vm1732 = vcmask 7168
  %1733 = vst.msk [vmem:[%s8] sm:$0xff] %vm1732, %v1729
  // Predicated region
  $region34: #{gru_model_forward.1} parent=0 // pred_check
    _
  $region35: #{gru_model_forward.1} parent=0 // pred_check_branch
    %1735 = sbr.rel (0) target = $region37
  $region36: #{gru_model_forward.1} parent=0 // pred_region
    _
  $region37: #{gru_model_forward.1} parent=0 // pred_fallthru
    _
  // Predicated region
  $region38: #{gru_model_forward.1} parent=0 // pred_check
    _
  $region39: #{gru_model_forward.1} parent=0 // pred_check_branch
    %1737 = sbr.rel (0) target = $region41
  $region40: #{gru_model_forward.1} parent=0 // pred_region
    _
  $region41: #{gru_model_forward.1} parent=0 // pred_fallthru
    _

</llo_original>
